<compile_context>
chip_gen: v5e
topology: v5e:2x2
jax: 0.10.0
libtpu: 0.0.40
codegen_flags: <defaults>
</compile_context>

<pallas_src>
import functools

import jax
import jax.numpy as jnp
from jax.experimental import pallas as pl
from jax.experimental.pallas import tpu as pltpu


# ----------------------------- Pallas recurrence kernel -----------------------------
def _bilstm_chunk_kernel(H, TC,
                         lens_ref, gf_ref, gb_ref, whh_f_ref, whh_b_ref,
                         out_f_ref, out_b_ref,
                         state_ref):
    """One grid step = one time-chunk.

    Forward direction consumes chunk c (ascending t); backward direction consumes
    chunk nc-1-c (descending t). Input gates (x @ W_ih + b) are precomputed, so
    each timestep only does the (B,H)x(H,4H) recurrent matmul per direction.
    State lives in vregs (fori_loop carry); VMEM scratch only at chunk boundaries.
    """
    c = pl.program_id(0)
    nc = pl.num_programs(0)

    @pl.when(c == 0)
    def _():
        state_ref[...] = jnp.zeros_like(state_ref)

    lens = lens_ref[...]          # (B, 1) int32, resident constant block
    whh_f = whh_f_ref[...]        # (H, 4H), resident
    whh_b = whh_b_ref[...]        # (H, 4H), resident

    def cell(g_in, h, c_state, whh):
        gates = g_in + jnp.dot(h, whh, preferred_element_type=jnp.float32)
        i = jax.nn.sigmoid(gates[:, 0 * H:1 * H])
        f = jax.nn.sigmoid(gates[:, 1 * H:2 * H])
        g = jnp.tanh(gates[:, 2 * H:3 * H])
        o = jax.nn.sigmoid(gates[:, 3 * H:4 * H])
        c_new = f * c_state + i * g
        h_new = o * jnp.tanh(c_new)
        return h_new, c_new

    def body(j, carry):
        h_f, c_f, h_b, c_b = carry

        # ---- forward direction: global time = c*TC + j ----
        t_f = c * TC + j
        valid_f = t_f < lens                               # (B, 1) bool
        hf_n, cf_n = cell(gf_ref[j], h_f, c_f, whh_f)
        h_f = jnp.where(valid_f, hf_n, h_f)
        c_f = jnp.where(valid_f, cf_n, c_f)
        out_f_ref[j] = jnp.where(valid_f, hf_n, 0.0)       # padded positions -> exact 0

        # ---- backward direction: chunk nc-1-c, local index TC-1-j (descending t) ----
        jr = TC - 1 - j
        t_b = (nc - 1 - c) * TC + jr
        valid_b = t_b < lens
        hb_n, cb_n = cell(gb_ref[jr], h_b, c_b, whh_b)
        h_b = jnp.where(valid_b, hb_n, h_b)
        c_b = jnp.where(valid_b, cb_n, c_b)
        out_b_ref[jr] = jnp.where(valid_b, hb_n, 0.0)

        return (h_f, c_f, h_b, c_b)

    init = (state_ref[0], state_ref[1], state_ref[2], state_ref[3])
    h_f, c_f, h_b, c_b = jax.lax.fori_loop(0, TC, body, init, unroll=True)
    state_ref[0] = h_f
    state_ref[1] = c_f
    state_ref[2] = h_b
    state_ref[3] = c_b


def bilstm_recurrence(gates_f, gates_b, lens_b1, whh_f, whh_b, *, time_chunk=8):
    """Run the recurrent part of one biLSTM layer.

    gates_f/gates_b: (T, B, 4H) precomputed x @ W_ih + b per direction.
    lens_b1: (B, 1) int32 valid lengths.  Returns (out_f, out_b), each (T, B, H).
    """
    T, B, G = gates_f.shape
    H = G // 4
    TC = int(time_chunk)
    T_pad = -(-T // TC) * TC
    nc = T_pad // TC
    if T_pad != T:
        pad = ((0, T_pad - T), (0, 0), (0, 0))
        gates_f = jnp.pad(gates_f, pad)
        gates_b = jnp.pad(gates_b, pad)

    kern = functools.partial(_bilstm_chunk_kernel, H, TC)

    out_f, out_b = pl.pallas_call(
        kern,
        out_shape=(jax.ShapeDtypeStruct((T_pad, B, H), jnp.float32),
                   jax.ShapeDtypeStruct((T_pad, B, H), jnp.float32)),
        grid_spec=pltpu.PrefetchScalarGridSpec(
            num_scalar_prefetch=0,
            grid=(nc,),
            in_specs=[
                # sequence lengths (constant, resident)
                pl.BlockSpec((B, 1), lambda c: (0, 0)),
                # precomputed input gates: forward chunk c, backward chunk nc-1-c
                pl.BlockSpec((TC, B, G), lambda c: (c, 0, 0)),
                pl.BlockSpec((TC, B, G), lambda c: (nc - 1 - c, 0, 0)),
                # recurrent weights (constant, resident)
                pl.BlockSpec((H, G), lambda c: (0, 0)),
                pl.BlockSpec((H, G), lambda c: (0, 0)),
            ],
            out_specs=[
                pl.BlockSpec((TC, B, H), lambda c: (c, 0, 0)),
                pl.BlockSpec((TC, B, H), lambda c: (nc - 1 - c, 0, 0)),
            ],
            # h_f, c_f, h_b, c_b packed into one scratch; touched only at chunk edges
            scratch_shapes=[pltpu.VMEM((4, B, H), jnp.float32)],
        ),
        compiler_params=pltpu.CompilerParams(
            dimension_semantics=("arbitrary",)),   # recurrence: sequential grid
    )(lens_b1, gates_f, gates_b, whh_f, whh_b)

    return out_f[:T], out_b[:T]


# ----------------------------- wrapper (full RNNEncoder) -----------------------------
def _input_gates(parts, wih, b):
    """Hoisted input projection: sum_k parts[k] @ wih[rows_k] + b, one big matmul each."""
    off = 0
    acc = None
    for p in parts:
        d = p.shape[-1]
        term = jnp.einsum('tbd,dg->tbg', p, wih[off:off + d],
                          preferred_element_type=jnp.float32)
        acc = term if acc is None else acc + term
        off += d
    return acc + b            # b: (1, 4H) broadcasts over (T, B, 4H)


def rnn_encoder_forward(embedded_btd, mask_bt, layer_params, *, time_chunk=8):
    """RNNEncoder.forward at inference (dropout off, no in_proj, no shortcut)."""
    B, T, _ = embedded_btd.shape
    seq_lens = T - jnp.sum(mask_bt.astype(jnp.int32), axis=1)          # (B,)
    lens_b1 = seq_lens[:, None].astype(jnp.int32)                      # (B, 1)

    x = jnp.transpose(embedded_btd, (1, 0, 2)).astype(jnp.float32)     # (T, B, D)
    parts = [x]
    for (wih_f, whh_f, b_f, wih_b, whh_b, b_b) in layer_params:
        gf = _input_gates(parts, wih_f, b_f)                           # (T, B, 4H)
        gb = _input_gates(parts, wih_b, b_b)
        out_f, out_b = bilstm_recurrence(gf, gb, lens_b1, whh_f, whh_b,
                                         time_chunk=time_chunk)
        parts = [out_f, out_b]   # no per-layer concat; next layer's W_ih is split

    h = jnp.concatenate(parts, axis=-1) if len(parts) > 1 else parts[0]
    return jnp.transpose(h, (1, 0, 2))                                 # (B, T, hid_dim)


# ---------------- pure-JAX reference (lax.scan) for correctness checks ----------------
def _ref_dir(x_tbd, valid_tb1, wih, whh, b, reverse):
    T, B, _ = x_tbd.shape
    H = whh.shape[0]

    def step(carry, inp):
        h, c = carry
        x, v = inp
        gates = x @ wih + h @ whh + b
        i = jax.nn.sigmoid(gates[:, :H])
        f = jax.nn.sigmoid(gates[:, H:2 * H])
        g = jnp.tanh(gates[:, 2 * H:3 * H])
        o = jax.nn.sigmoid(gates[:, 3 * H:])
        c_new = f * c + i * g
        h_new = o * jnp.tanh(c_new)
        return (v * h_new + (1 - v) * h, v * c_new + (1 - v) * c), v * h_new

    xs = (x_tbd[::-1], valid_tb1[::-1]) if reverse else (x_tbd, valid_tb1)
    init = (jnp.zeros((B, H), jnp.float32), jnp.zeros((B, H), jnp.float32))
    _, outs = jax.lax.scan(step, init, xs)
    return outs[::-1] if reverse else outs


def rnn_encoder_ref(embedded_btd, mask_bt, layer_params):
    B, T, _ = embedded_btd.shape
    seq_lens = T - jnp.sum(mask_bt.astype(jnp.int32), axis=1)
    valid = (jnp.arange(T)[:, None] < seq_lens[None, :]).astype(jnp.float32)[..., None]
    h = jnp.transpose(embedded_btd, (1, 0, 2)).astype(jnp.float32)
    for (wih_f, whh_f, b_f, wih_b, whh_b, b_b) in layer_params:
        of = _ref_dir(h, valid, wih_f, whh_f, b_f, reverse=False)
        ob = _ref_dir(h, valid, wih_b, whh_b, b_b, reverse=True)
        h = jnp.concatenate([of, ob], axis=-1)
    return jnp.transpose(h, (1, 0, 2))


def init_params(key, in_dim, hid_dim, num_layers):
    """Synthetic LSTM params. PyTorch W_ih:(4H,D)/W_hh:(4H,H) stored transposed;
    b = b_ih + b_hh (mathematically equivalent). Gate order i,f,g,o."""
    H = hid_dim // 2
    params = []
    d = in_dim
    for _ in range(num_layers):
        key, *ks = jax.random.split(key, 7)
        u = lambda k, s: jax.random.uniform(k, s, jnp.float32, -0.1, 0.1)
        params.append((u(ks[0], (d, 4 * H)), u(ks[1], (H, 4 * H)), u(ks[2], (1, 4 * H)),
                       u(ks[3], (d, 4 * H)), u(ks[4], (H, 4 * H)), u(ks[5], (1, 4 * H))))
        d = 2 * H
    return params


if __name__ == "__main__":
    key = jax.random.PRNGKey(0)

    # --- check 1: default config (num_layers=1), T=8, multi-chunk recurrence (TC=4) ---
    B, T, D, HID = 2, 8, 32, 32
    k_emb, k_par, key = jax.random.split(key, 3)
    embedded = jax.random.normal(k_emb, (B, T, D), jnp.float32)
    lens = jnp.array([8, 5], jnp.int32)
    mask = jnp.arange(T)[None, :] >= lens[:, None]                     # True = pad
    params = init_params(k_par, D, HID, 1)

    out = jax.jit(lambda e, m: rnn_encoder_forward(e, m, params, time_chunk=4))(embedded, mask)
    out = jax.block_until_ready(out)
    ref = rnn_encoder_ref(embedded, mask, params)
    assert out.shape == (B, T, HID)
    assert jnp.allclose(out, ref, atol=1e-5, rtol=1e-5), "layer-1 mismatch vs reference"
    assert float(jnp.abs(out[1, 5:]).max()) == 0.0, "padded positions must be exactly 0"

    # --- check 2: 2 layers, T=10 (exercises time padding T->12 with TC=4) ---
    B2, T2 = 2, 10
    k_emb2, k_par2, key = jax.random.split(key, 3)
    embedded2 = jax.random.normal(k_emb2, (B2, T2, D), jnp.float32)
    lens2 = jnp.array([10, 7], jnp.int32)
    mask2 = jnp.arange(T2)[None, :] >= lens2[:, None]
    params2 = init_params(k_par2, D, HID, 2)

    out2 = jax.jit(lambda e, m: rnn_encoder_forward(e, m, params2, time_chunk=4))(embedded2, mask2)
    out2 = jax.block_until_ready(out2)
    ref2 = rnn_encoder_ref(embedded2, mask2, params2)
    assert out2.shape == (B2, T2, HID)
    assert jnp.allclose(out2, ref2, atol=1e-5, rtol=1e-5), "layer-2 mismatch vs reference"
    assert float(jnp.abs(out2[1, 7:]).max()) == 0.0, "padded positions must be exactly 0"

    print("KERNEL_OK")
</pallas_src>

<mosaic_0001>
module attributes {stable_mosaic.version = 11 : i64} {
  func.func @_bilstm_chunk_kernel(%arg0: i32, %arg1: memref<2x1xi32, #tpu.memory_space<vmem>>, %arg2: memref<4x2x64xf32, #tpu.memory_space<vmem>>, %arg3: memref<4x2x64xf32, #tpu.memory_space<vmem>>, %arg4: memref<16x64xf32, #tpu.memory_space<vmem>>, %arg5: memref<16x64xf32, #tpu.memory_space<vmem>>, %arg6: memref<4x2x16xf32, #tpu.memory_space<vmem>>, %arg7: memref<4x2x16xf32, #tpu.memory_space<vmem>>, %arg8: memref<4x2x16xf32, #tpu.memory_space<vmem>>) attributes {dimension_semantics = [#tpu.dimension_semantics<arbitrary>], iteration_bounds = array<i64: 2>, scalar_prefetch = 0 : i64, scratch_operands = 1 : i64, tpu.core_type = #tpu.core_type<tc>, window_params = [{pipeline_mode = #tpu.pipeline_mode<synchronous>, transform_indices = @transform_0, window_bounds = array<i64: 2, 1>}, {transform_indices = @transform_1, window_bounds = array<i64: 4, 2, 64>}, {transform_indices = @transform_2, window_bounds = array<i64: 4, 2, 64>}, {pipeline_mode = #tpu.pipeline_mode<synchronous>, transform_indices = @transform_3, window_bounds = array<i64: 16, 64>}, {pipeline_mode = #tpu.pipeline_mode<synchronous>, transform_indices = @transform_4, window_bounds = array<i64: 16, 64>}, {transform_indices = @transform_5, window_bounds = array<i64: 4, 2, 16>}, {transform_indices = @transform_6, window_bounds = array<i64: 4, 2, 16>}]} {
    %c0_i32 = arith.constant 0 : i32
    %0 = arith.cmpi eq, %arg0, %c0_i32 : i32
    %1 = arith.extui %0 : i1 to i32
    %c0_i32_0 = arith.constant 0 : i32
    %2 = arith.cmpi ne, %1, %c0_i32_0 : i32
    scf.if %2 {
      %cst_115 = arith.constant 0.000000e+00 : f32
      %418 = vector.broadcast %cst_115 : f32 to vector<4x2x16xf32>
      %c0_116 = arith.constant 0 : index
      %c0_117 = arith.constant 0 : index
      %c0_118 = arith.constant 0 : index
      %419 = vector.load %arg8[%c0_116, %c0_117, %c0_118] : memref<4x2x16xf32, #tpu.memory_space<vmem>>, vector<4x2x16xf32>
      tpu.vector_store %arg8[%c0_116, %c0_117, %c0_118], %418 {strides = array<i32>} : memref<4x2x16xf32, #tpu.memory_space<vmem>>, vector<4x2x16xf32>,
    } else {
    }
    %c0 = arith.constant 0 : index
    %c0_1 = arith.constant 0 : index
    %3 = vector.load %arg1[%c0, %c0_1] : memref<2x1xi32, #tpu.memory_space<vmem>>, vector<2x1xi32>
    %c0_2 = arith.constant 0 : index
    %c0_3 = arith.constant 0 : index
    %4 = vector.load %arg4[%c0_2, %c0_3] : memref<16x64xf32, #tpu.memory_space<vmem>>, vector<16x64xf32>
    %c0_4 = arith.constant 0 : index
    %c0_5 = arith.constant 0 : index
    %5 = vector.load %arg5[%c0_4, %c0_5] : memref<16x64xf32, #tpu.memory_space<vmem>>, vector<16x64xf32>
    %c0_6 = arith.constant 0 : index
    %c0_7 = arith.constant 0 : index
    %c0_8 = arith.constant 0 : index
    %6 = vector.load %arg8[%c0_6, %c0_7, %c0_8] : memref<4x2x16xf32, #tpu.memory_space<vmem>>, vector<1x2x16xf32>
    %7 = vector.shape_cast %6 : vector<1x2x16xf32> to vector<2x16xf32>
    %c1 = arith.constant 1 : index
    %c0_9 = arith.constant 0 : index
    %c0_10 = arith.constant 0 : index
    %8 = vector.load %arg8[%c1, %c0_9, %c0_10] : memref<4x2x16xf32, #tpu.memory_space<vmem>>, vector<1x2x16xf32>
    %9 = vector.shape_cast %8 : vector<1x2x16xf32> to vector<2x16xf32>
    %c2 = arith.constant 2 : index
    %c0_11 = arith.constant 0 : index
    %c0_12 = arith.constant 0 : index
    %10 = vector.load %arg8[%c2, %c0_11, %c0_12] : memref<4x2x16xf32, #tpu.memory_space<vmem>>, vector<1x2x16xf32>
    %11 = vector.shape_cast %10 : vector<1x2x16xf32> to vector<2x16xf32>
    %c3 = arith.constant 3 : index
    %c0_13 = arith.constant 0 : index
    %c0_14 = arith.constant 0 : index
    %12 = vector.load %arg8[%c3, %c0_13, %c0_14] : memref<4x2x16xf32, #tpu.memory_space<vmem>>, vector<1x2x16xf32>
    %13 = vector.shape_cast %12 : vector<1x2x16xf32> to vector<2x16xf32>
    %c0_i32_15 = arith.constant 0 : i32
    %c4_i32 = arith.constant 4 : i32
    %14 = arith.muli %arg0, %c4_i32 : i32
    %15 = arith.addi %14, %c0_i32_15 : i32
    %16 = vector.broadcast %15 : i32 to vector<2x1xi32>
    %17 = arith.cmpi slt, %16, %3 : vector<2x1xi32>
    %18 = arith.index_cast %c0_i32_15 : i32 to index
    %c0_16 = arith.constant 0 : index
    %c0_17 = arith.constant 0 : index
    %19 = vector.load %arg2[%18, %c0_16, %c0_17] : memref<4x2x64xf32, #tpu.memory_space<vmem>>, vector<1x2x64xf32>
    %20 = vector.shape_cast %19 : vector<1x2x64xf32> to vector<2x64xf32>
    %cst = arith.constant dense<0.000000e+00> : vector<2x64xf32>
    %21 = tpu.matmul %7, %4, %cst {dimension_numbers = #tpu.dot_dimension_numbers<[1], [0], [0], [1], [0, 0, 1, 1], [], []>} : vector<2x16xf32>, vector<16x64xf32>, vector<2x64xf32> -> vector<2x64xf32>
    %22 = arith.addf %20, %21 : vector<2x64xf32>
    %23 = vector.extract_strided_slice %22 {offsets = [0, 0], sizes = [2, 16], strides = [1, 1]} : vector<2x64xf32> to vector<2x16xf32>
    %24 = arith.negf %23 : vector<2x16xf32>
    %25 = math.exp %24 : vector<2x16xf32>
    %cst_18 = arith.constant 1.000000e+00 : f32
    %26 = vector.broadcast %cst_18 : f32 to vector<2x16xf32>
    %27 = arith.addf %26, %25 : vector<2x16xf32>
    %28 = arith.divf %26, %27 : vector<2x16xf32>
    %29 = vector.extract_strided_slice %22 {offsets = [0, 16], sizes = [2, 16], strides = [1, 1]} : vector<2x64xf32> to vector<2x16xf32>
    %30 = arith.negf %29 : vector<2x16xf32>
    %31 = math.exp %30 : vector<2x16xf32>
    %cst_19 = arith.constant 1.000000e+00 : f32
    %32 = vector.broadcast %cst_19 : f32 to vector<2x16xf32>
    %33 = arith.addf %32, %31 : vector<2x16xf32>
    %34 = arith.divf %32, %33 : vector<2x16xf32>
    %35 = vector.extract_strided_slice %22 {offsets = [0, 32], sizes = [2, 16], strides = [1, 1]} : vector<2x64xf32> to vector<2x16xf32>
    %36 = math.tanh %35 : vector<2x16xf32>
    %37 = vector.extract_strided_slice %22 {offsets = [0, 48], sizes = [2, 16], strides = [1, 1]} : vector<2x64xf32> to vector<2x16xf32>
    %38 = arith.negf %37 : vector<2x16xf32>
    %39 = math.exp %38 : vector<2x16xf32>
    %cst_20 = arith.constant 1.000000e+00 : f32
    %40 = vector.broadcast %cst_20 : f32 to vector<2x16xf32>
    %41 = arith.addf %40, %39 : vector<2x16xf32>
    %42 = arith.divf %40, %41 : vector<2x16xf32>
    %43 = arith.mulf %34, %9 : vector<2x16xf32>
    %44 = arith.mulf %28, %36 : vector<2x16xf32>
    %45 = arith.addf %43, %44 : vector<2x16xf32>
    %46 = math.tanh %45 : vector<2x16xf32>
    %47 = arith.mulf %42, %46 : vector<2x16xf32>
    %48 = vector.shape_cast %17 : vector<2x1xi1> to vector<2x1xi1>
    %49 = vector.broadcast %48 : vector<2x1xi1> to vector<2x16xi1>
    %50 = arith.select %49, %47, %7 : vector<2x16xi1>, vector<2x16xf32>
    %51 = vector.shape_cast %17 : vector<2x1xi1> to vector<2x1xi1>
    %52 = vector.broadcast %51 : vector<2x1xi1> to vector<2x16xi1>
    %53 = arith.select %52, %45, %9 : vector<2x16xi1>, vector<2x16xf32>
    %cst_21 = arith.constant 0.000000e+00 : f32
    %54 = vector.shape_cast %17 : vector<2x1xi1> to vector<2x1xi1>
    %55 = vector.broadcast %54 : vector<2x1xi1> to vector<2x16xi1>
    %56 = vector.broadcast %cst_21 : f32 to vector<2x16xf32>
    %57 = arith.select %55, %47, %56 : vector<2x16xi1>, vector<2x16xf32>
    %58 = arith.index_cast %c0_i32_15 : i32 to index
    %c0_22 = arith.constant 0 : index
    %c0_23 = arith.constant 0 : index
    %59 = vector.load %arg6[%58, %c0_22, %c0_23] : memref<4x2x16xf32, #tpu.memory_space<vmem>>, vector<1x2x16xf32>
    %60 = vector.shape_cast %59 : vector<1x2x16xf32> to vector<2x16xf32>
    %61 = vector.shape_cast %57 : vector<2x16xf32> to vector<1x2x16xf32>
    tpu.vector_store %arg6[%58, %c0_22, %c0_23], %61 {strides = array<i32>} : memref<4x2x16xf32, #tpu.memory_space<vmem>>, vector<1x2x16xf32>,
    %c3_i32 = arith.constant 3 : i32
    %62 = arith.subi %c3_i32, %c0_i32_15 : i32
    %c1_i32 = arith.constant 1 : i32
    %63 = arith.subi %c1_i32, %arg0 : i32
    %c4_i32_24 = arith.constant 4 : i32
    %64 = arith.muli %63, %c4_i32_24 : i32
    %65 = arith.addi %64, %62 : i32
    %66 = vector.broadcast %65 : i32 to vector<2x1xi32>
    %67 = arith.cmpi slt, %66, %3 : vector<2x1xi32>
    %68 = arith.index_cast %62 : i32 to index
    %c0_25 = arith.constant 0 : index
    %c0_26 = arith.constant 0 : index
    %69 = vector.load %arg3[%68, %c0_25, %c0_26] : memref<4x2x64xf32, #tpu.memory_space<vmem>>, vector<1x2x64xf32>
    %70 = vector.shape_cast %69 : vector<1x2x64xf32> to vector<2x64xf32>
    %cst_27 = arith.constant dense<0.000000e+00> : vector<2x64xf32>
    %71 = tpu.matmul %11, %5, %cst_27 {dimension_numbers = #tpu.dot_dimension_numbers<[1], [0], [0], [1], [0, 0, 1, 1], [], []>} : vector<2x16xf32>, vector<16x64xf32>, vector<2x64xf32> -> vector<2x64xf32>
    %72 = arith.addf %70, %71 : vector<2x64xf32>
    %73 = vector.extract_strided_slice %72 {offsets = [0, 0], sizes = [2, 16], strides = [1, 1]} : vector<2x64xf32> to vector<2x16xf32>
    %74 = arith.negf %73 : vector<2x16xf32>
    %75 = math.exp %74 : vector<2x16xf32>
    %cst_28 = arith.constant 1.000000e+00 : f32
    %76 = vector.broadcast %cst_28 : f32 to vector<2x16xf32>
    %77 = arith.addf %76, %75 : vector<2x16xf32>
    %78 = arith.divf %76, %77 : vector<2x16xf32>
    %79 = vector.extract_strided_slice %72 {offsets = [0, 16], sizes = [2, 16], strides = [1, 1]} : vector<2x64xf32> to vector<2x16xf32>
    %80 = arith.negf %79 : vector<2x16xf32>
    %81 = math.exp %80 : vector<2x16xf32>
    %cst_29 = arith.constant 1.000000e+00 : f32
    %82 = vector.broadcast %cst_29 : f32 to vector<2x16xf32>
    %83 = arith.addf %82, %81 : vector<2x16xf32>
    %84 = arith.divf %82, %83 : vector<2x16xf32>
    %85 = vector.extract_strided_slice %72 {offsets = [0, 32], sizes = [2, 16], strides = [1, 1]} : vector<2x64xf32> to vector<2x16xf32>
    %86 = math.tanh %85 : vector<2x16xf32>
    %87 = vector.extract_strided_slice %72 {offsets = [0, 48], sizes = [2, 16], strides = [1, 1]} : vector<2x64xf32> to vector<2x16xf32>
    %88 = arith.negf %87 : vector<2x16xf32>
    %89 = math.exp %88 : vector<2x16xf32>
    %cst_30 = arith.constant 1.000000e+00 : f32
    %90 = vector.broadcast %cst_30 : f32 to vector<2x16xf32>
    %91 = arith.addf %90, %89 : vector<2x16xf32>
    %92 = arith.divf %90, %91 : vector<2x16xf32>
    %93 = arith.mulf %84, %13 : vector<2x16xf32>
    %94 = arith.mulf %78, %86 : vector<2x16xf32>
    %95 = arith.addf %93, %94 : vector<2x16xf32>
    %96 = math.tanh %95 : vector<2x16xf32>
    %97 = arith.mulf %92, %96 : vector<2x16xf32>
    %98 = vector.shape_cast %67 : vector<2x1xi1> to vector<2x1xi1>
    %99 = vector.broadcast %98 : vector<2x1xi1> to vector<2x16xi1>
    %100 = arith.select %99, %97, %11 : vector<2x16xi1>, vector<2x16xf32>
    %101 = vector.shape_cast %67 : vector<2x1xi1> to vector<2x1xi1>
    %102 = vector.broadcast %101 : vector<2x1xi1> to vector<2x16xi1>
    %103 = arith.select %102, %95, %13 : vector<2x16xi1>, vector<2x16xf32>
    %cst_31 = arith.constant 0.000000e+00 : f32
    %104 = vector.shape_cast %67 : vector<2x1xi1> to vector<2x1xi1>
    %105 = vector.broadcast %104 : vector<2x1xi1> to vector<2x16xi1>
    %106 = vector.broadcast %cst_31 : f32 to vector<2x16xf32>
    %107 = arith.select %105, %97, %106 : vector<2x16xi1>, vector<2x16xf32>
    %108 = arith.index_cast %62 : i32 to index
    %c0_32 = arith.constant 0 : index
    %c0_33 = arith.constant 0 : index
    %109 = vector.load %arg7[%108, %c0_32, %c0_33] : memref<4x2x16xf32, #tpu.memory_space<vmem>>, vector<1x2x16xf32>
    %110 = vector.shape_cast %109 : vector<1x2x16xf32> to vector<2x16xf32>
    %111 = vector.shape_cast %107 : vector<2x16xf32> to vector<1x2x16xf32>
    tpu.vector_store %arg7[%108, %c0_32, %c0_33], %111 {strides = array<i32>} : memref<4x2x16xf32, #tpu.memory_space<vmem>>, vector<1x2x16xf32>,
    %c1_i32_34 = arith.constant 1 : i32
    %c4_i32_35 = arith.constant 4 : i32
    %112 = arith.muli %arg0, %c4_i32_35 : i32
    %113 = arith.addi %112, %c1_i32_34 : i32
    %114 = vector.broadcast %113 : i32 to vector<2x1xi32>
    %115 = arith.cmpi slt, %114, %3 : vector<2x1xi32>
    %116 = arith.index_cast %c1_i32_34 : i32 to index
    %c0_36 = arith.constant 0 : index
    %c0_37 = arith.constant 0 : index
    %117 = vector.load %arg2[%116, %c0_36, %c0_37] : memref<4x2x64xf32, #tpu.memory_space<vmem>>, vector<1x2x64xf32>
    %118 = vector.shape_cast %117 : vector<1x2x64xf32> to vector<2x64xf32>
    %cst_38 = arith.constant dense<0.000000e+00> : vector<2x64xf32>
    %119 = tpu.matmul %50, %4, %cst_38 {dimension_numbers = #tpu.dot_dimension_numbers<[1], [0], [0], [1], [0, 0, 1, 1], [], []>} : vector<2x16xf32>, vector<16x64xf32>, vector<2x64xf32> -> vector<2x64xf32>
    %120 = arith.addf %118, %119 : vector<2x64xf32>
    %121 = vector.extract_strided_slice %120 {offsets = [0, 0], sizes = [2, 16], strides = [1, 1]} : vector<2x64xf32> to vector<2x16xf32>
    %122 = arith.negf %121 : vector<2x16xf32>
    %123 = math.exp %122 : vector<2x16xf32>
    %cst_39 = arith.constant 1.000000e+00 : f32
    %124 = vector.broadcast %cst_39 : f32 to vector<2x16xf32>
    %125 = arith.addf %124, %123 : vector<2x16xf32>
    %126 = arith.divf %124, %125 : vector<2x16xf32>
    %127 = vector.extract_strided_slice %120 {offsets = [0, 16], sizes = [2, 16], strides = [1, 1]} : vector<2x64xf32> to vector<2x16xf32>
    %128 = arith.negf %127 : vector<2x16xf32>
    %129 = math.exp %128 : vector<2x16xf32>
    %cst_40 = arith.constant 1.000000e+00 : f32
    %130 = vector.broadcast %cst_40 : f32 to vector<2x16xf32>
    %131 = arith.addf %130, %129 : vector<2x16xf32>
    %132 = arith.divf %130, %131 : vector<2x16xf32>
    %133 = vector.extract_strided_slice %120 {offsets = [0, 32], sizes = [2, 16], strides = [1, 1]} : vector<2x64xf32> to vector<2x16xf32>
    %134 = math.tanh %133 : vector<2x16xf32>
    %135 = vector.extract_strided_slice %120 {offsets = [0, 48], sizes = [2, 16], strides = [1, 1]} : vector<2x64xf32> to vector<2x16xf32>
    %136 = arith.negf %135 : vector<2x16xf32>
    %137 = math.exp %136 : vector<2x16xf32>
    %cst_41 = arith.constant 1.000000e+00 : f32
    %138 = vector.broadcast %cst_41 : f32 to vector<2x16xf32>
    %139 = arith.addf %138, %137 : vector<2x16xf32>
    %140 = arith.divf %138, %139 : vector<2x16xf32>
    %141 = arith.mulf %132, %53 : vector<2x16xf32>
    %142 = arith.mulf %126, %134 : vector<2x16xf32>
    %143 = arith.addf %141, %142 : vector<2x16xf32>
    %144 = math.tanh %143 : vector<2x16xf32>
    %145 = arith.mulf %140, %144 : vector<2x16xf32>
    %146 = vector.shape_cast %115 : vector<2x1xi1> to vector<2x1xi1>
    %147 = vector.broadcast %146 : vector<2x1xi1> to vector<2x16xi1>
    %148 = arith.select %147, %145, %50 : vector<2x16xi1>, vector<2x16xf32>
    %149 = vector.shape_cast %115 : vector<2x1xi1> to vector<2x1xi1>
    %150 = vector.broadcast %149 : vector<2x1xi1> to vector<2x16xi1>
    %151 = arith.select %150, %143, %53 : vector<2x16xi1>, vector<2x16xf32>
    %cst_42 = arith.constant 0.000000e+00 : f32
    %152 = vector.shape_cast %115 : vector<2x1xi1> to vector<2x1xi1>
    %153 = vector.broadcast %152 : vector<2x1xi1> to vector<2x16xi1>
    %154 = vector.broadcast %cst_42 : f32 to vector<2x16xf32>
    %155 = arith.select %153, %145, %154 : vector<2x16xi1>, vector<2x16xf32>
    %156 = arith.index_cast %c1_i32_34 : i32 to index
    %c0_43 = arith.constant 0 : index
    %c0_44 = arith.constant 0 : index
    %157 = vector.load %arg6[%156, %c0_43, %c0_44] : memref<4x2x16xf32, #tpu.memory_space<vmem>>, vector<1x2x16xf32>
    %158 = vector.shape_cast %157 : vector<1x2x16xf32> to vector<2x16xf32>
    %159 = vector.shape_cast %155 : vector<2x16xf32> to vector<1x2x16xf32>
    tpu.vector_store %arg6[%156, %c0_43, %c0_44], %159 {strides = array<i32>} : memref<4x2x16xf32, #tpu.memory_space<vmem>>, vector<1x2x16xf32>,
    %c3_i32_45 = arith.constant 3 : i32
    %160 = arith.subi %c3_i32_45, %c1_i32_34 : i32
    %c1_i32_46 = arith.constant 1 : i32
    %161 = arith.subi %c1_i32_46, %arg0 : i32
    %c4_i32_47 = arith.constant 4 : i32
    %162 = arith.muli %161, %c4_i32_47 : i32
    %163 = arith.addi %162, %160 : i32
    %164 = vector.broadcast %163 : i32 to vector<2x1xi32>
    %165 = arith.cmpi slt, %164, %3 : vector<2x1xi32>
    %166 = arith.index_cast %160 : i32 to index
    %c0_48 = arith.constant 0 : index
    %c0_49 = arith.constant 0 : index
    %167 = vector.load %arg3[%166, %c0_48, %c0_49] : memref<4x2x64xf32, #tpu.memory_space<vmem>>, vector<1x2x64xf32>
    %168 = vector.shape_cast %167 : vector<1x2x64xf32> to vector<2x64xf32>
    %cst_50 = arith.constant dense<0.000000e+00> : vector<2x64xf32>
    %169 = tpu.matmul %100, %5, %cst_50 {dimension_numbers = #tpu.dot_dimension_numbers<[1], [0], [0], [1], [0, 0, 1, 1], [], []>} : vector<2x16xf32>, vector<16x64xf32>, vector<2x64xf32> -> vector<2x64xf32>
    %170 = arith.addf %168, %169 : vector<2x64xf32>
    %171 = vector.extract_strided_slice %170 {offsets = [0, 0], sizes = [2, 16], strides = [1, 1]} : vector<2x64xf32> to vector<2x16xf32>
    %172 = arith.negf %171 : vector<2x16xf32>
    %173 = math.exp %172 : vector<2x16xf32>
    %cst_51 = arith.constant 1.000000e+00 : f32
    %174 = vector.broadcast %cst_51 : f32 to vector<2x16xf32>
    %175 = arith.addf %174, %173 : vector<2x16xf32>
    %176 = arith.divf %174, %175 : vector<2x16xf32>
    %177 = vector.extract_strided_slice %170 {offsets = [0, 16], sizes = [2, 16], strides = [1, 1]} : vector<2x64xf32> to vector<2x16xf32>
    %178 = arith.negf %177 : vector<2x16xf32>
    %179 = math.exp %178 : vector<2x16xf32>
    %cst_52 = arith.constant 1.000000e+00 : f32
    %180 = vector.broadcast %cst_52 : f32 to vector<2x16xf32>
    %181 = arith.addf %180, %179 : vector<2x16xf32>
    %182 = arith.divf %180, %181 : vector<2x16xf32>
    %183 = vector.extract_strided_slice %170 {offsets = [0, 32], sizes = [2, 16], strides = [1, 1]} : vector<2x64xf32> to vector<2x16xf32>
    %184 = math.tanh %183 : vector<2x16xf32>
    %185 = vector.extract_strided_slice %170 {offsets = [0, 48], sizes = [2, 16], strides = [1, 1]} : vector<2x64xf32> to vector<2x16xf32>
    %186 = arith.negf %185 : vector<2x16xf32>
    %187 = math.exp %186 : vector<2x16xf32>
    %cst_53 = arith.constant 1.000000e+00 : f32
    %188 = vector.broadcast %cst_53 : f32 to vector<2x16xf32>
    %189 = arith.addf %188, %187 : vector<2x16xf32>
    %190 = arith.divf %188, %189 : vector<2x16xf32>
    %191 = arith.mulf %182, %103 : vector<2x16xf32>
    %192 = arith.mulf %176, %184 : vector<2x16xf32>
    %193 = arith.addf %191, %192 : vector<2x16xf32>
    %194 = math.tanh %193 : vector<2x16xf32>
    %195 = arith.mulf %190, %194 : vector<2x16xf32>
    %196 = vector.shape_cast %165 : vector<2x1xi1> to vector<2x1xi1>
    %197 = vector.broadcast %196 : vector<2x1xi1> to vector<2x16xi1>
    %198 = arith.select %197, %195, %100 : vector<2x16xi1>, vector<2x16xf32>
    %199 = vector.shape_cast %165 : vector<2x1xi1> to vector<2x1xi1>
    %200 = vector.broadcast %199 : vector<2x1xi1> to vector<2x16xi1>
    %201 = arith.select %200, %193, %103 : vector<2x16xi1>, vector<2x16xf32>
    %cst_54 = arith.constant 0.000000e+00 : f32
    %202 = vector.shape_cast %165 : vector<2x1xi1> to vector<2x1xi1>
    %203 = vector.broadcast %202 : vector<2x1xi1> to vector<2x16xi1>
    %204 = vector.broadcast %cst_54 : f32 to vector<2x16xf32>
    %205 = arith.select %203, %195, %204 : vector<2x16xi1>, vector<2x16xf32>
    %206 = arith.index_cast %160 : i32 to index
    %c0_55 = arith.constant 0 : index
    %c0_56 = arith.constant 0 : index
    %207 = vector.load %arg7[%206, %c0_55, %c0_56] : memref<4x2x16xf32, #tpu.memory_space<vmem>>, vector<1x2x16xf32>
    %208 = vector.shape_cast %207 : vector<1x2x16xf32> to vector<2x16xf32>
    %209 = vector.shape_cast %205 : vector<2x16xf32> to vector<1x2x16xf32>
    tpu.vector_store %arg7[%206, %c0_55, %c0_56], %209 {strides = array<i32>} : memref<4x2x16xf32, #tpu.memory_space<vmem>>, vector<1x2x16xf32>,
    %c2_i32 = arith.constant 2 : i32
    %c4_i32_57 = arith.constant 4 : i32
    %210 = arith.muli %arg0, %c4_i32_57 : i32
    %211 = arith.addi %210, %c2_i32 : i32
    %212 = vector.broadcast %211 : i32 to vector<2x1xi32>
    %213 = arith.cmpi slt, %212, %3 : vector<2x1xi32>
    %214 = arith.index_cast %c2_i32 : i32 to index
    %c0_58 = arith.constant 0 : index
    %c0_59 = arith.constant 0 : index
    %215 = vector.load %arg2[%214, %c0_58, %c0_59] : memref<4x2x64xf32, #tpu.memory_space<vmem>>, vector<1x2x64xf32>
    %216 = vector.shape_cast %215 : vector<1x2x64xf32> to vector<2x64xf32>
    %cst_60 = arith.constant dense<0.000000e+00> : vector<2x64xf32>
    %217 = tpu.matmul %148, %4, %cst_60 {dimension_numbers = #tpu.dot_dimension_numbers<[1], [0], [0], [1], [0, 0, 1, 1], [], []>} : vector<2x16xf32>, vector<16x64xf32>, vector<2x64xf32> -> vector<2x64xf32>
    %218 = arith.addf %216, %217 : vector<2x64xf32>
    %219 = vector.extract_strided_slice %218 {offsets = [0, 0], sizes = [2, 16], strides = [1, 1]} : vector<2x64xf32> to vector<2x16xf32>
    %220 = arith.negf %219 : vector<2x16xf32>
    %221 = math.exp %220 : vector<2x16xf32>
    %cst_61 = arith.constant 1.000000e+00 : f32
    %222 = vector.broadcast %cst_61 : f32 to vector<2x16xf32>
    %223 = arith.addf %222, %221 : vector<2x16xf32>
    %224 = arith.divf %222, %223 : vector<2x16xf32>
    %225 = vector.extract_strided_slice %218 {offsets = [0, 16], sizes = [2, 16], strides = [1, 1]} : vector<2x64xf32> to vector<2x16xf32>
    %226 = arith.negf %225 : vector<2x16xf32>
    %227 = math.exp %226 : vector<2x16xf32>
    %cst_62 = arith.constant 1.000000e+00 : f32
    %228 = vector.broadcast %cst_62 : f32 to vector<2x16xf32>
    %229 = arith.addf %228, %227 : vector<2x16xf32>
    %230 = arith.divf %228, %229 : vector<2x16xf32>
    %231 = vector.extract_strided_slice %218 {offsets = [0, 32], sizes = [2, 16], strides = [1, 1]} : vector<2x64xf32> to vector<2x16xf32>
    %232 = math.tanh %231 : vector<2x16xf32>
    %233 = vector.extract_strided_slice %218 {offsets = [0, 48], sizes = [2, 16], strides = [1, 1]} : vector<2x64xf32> to vector<2x16xf32>
    %234 = arith.negf %233 : vector<2x16xf32>
    %235 = math.exp %234 : vector<2x16xf32>
    %cst_63 = arith.constant 1.000000e+00 : f32
    %236 = vector.broadcast %cst_63 : f32 to vector<2x16xf32>
    %237 = arith.addf %236, %235 : vector<2x16xf32>
    %238 = arith.divf %236, %237 : vector<2x16xf32>
    %239 = arith.mulf %230, %151 : vector<2x16xf32>
    %240 = arith.mulf %224, %232 : vector<2x16xf32>
    %241 = arith.addf %239, %240 : vector<2x16xf32>
    %242 = math.tanh %241 : vector<2x16xf32>
    %243 = arith.mulf %238, %242 : vector<2x16xf32>
    %244 = vector.shape_cast %213 : vector<2x1xi1> to vector<2x1xi1>
    %245 = vector.broadcast %244 : vector<2x1xi1> to vector<2x16xi1>
    %246 = arith.select %245, %243, %148 : vector<2x16xi1>, vector<2x16xf32>
    %247 = vector.shape_cast %213 : vector<2x1xi1> to vector<2x1xi1>
    %248 = vector.broadcast %247 : vector<2x1xi1> to vector<2x16xi1>
    %249 = arith.select %248, %241, %151 : vector<2x16xi1>, vector<2x16xf32>
    %cst_64 = arith.constant 0.000000e+00 : f32
    %250 = vector.shape_cast %213 : vector<2x1xi1> to vector<2x1xi1>
    %251 = vector.broadcast %250 : vector<2x1xi1> to vector<2x16xi1>
    %252 = vector.broadcast %cst_64 : f32 to vector<2x16xf32>
    %253 = arith.select %251, %243, %252 : vector<2x16xi1>, vector<2x16xf32>
    %254 = arith.index_cast %c2_i32 : i32 to index
    %c0_65 = arith.constant 0 : index
    %c0_66 = arith.constant 0 : index
    %255 = vector.load %arg6[%254, %c0_65, %c0_66] : memref<4x2x16xf32, #tpu.memory_space<vmem>>, vector<1x2x16xf32>
    %256 = vector.shape_cast %255 : vector<1x2x16xf32> to vector<2x16xf32>
    %257 = vector.shape_cast %253 : vector<2x16xf32> to vector<1x2x16xf32>
    tpu.vector_store %arg6[%254, %c0_65, %c0_66], %257 {strides = array<i32>} : memref<4x2x16xf32, #tpu.memory_space<vmem>>, vector<1x2x16xf32>,
    %c3_i32_67 = arith.constant 3 : i32
    %258 = arith.subi %c3_i32_67, %c2_i32 : i32
    %c1_i32_68 = arith.constant 1 : i32
    %259 = arith.subi %c1_i32_68, %arg0 : i32
    %c4_i32_69 = arith.constant 4 : i32
    %260 = arith.muli %259, %c4_i32_69 : i32
    %261 = arith.addi %260, %258 : i32
    %262 = vector.broadcast %261 : i32 to vector<2x1xi32>
    %263 = arith.cmpi slt, %262, %3 : vector<2x1xi32>
    %264 = arith.index_cast %258 : i32 to index
    %c0_70 = arith.constant 0 : index
    %c0_71 = arith.constant 0 : index
    %265 = vector.load %arg3[%264, %c0_70, %c0_71] : memref<4x2x64xf32, #tpu.memory_space<vmem>>, vector<1x2x64xf32>
    %266 = vector.shape_cast %265 : vector<1x2x64xf32> to vector<2x64xf32>
    %cst_72 = arith.constant dense<0.000000e+00> : vector<2x64xf32>
    %267 = tpu.matmul %198, %5, %cst_72 {dimension_numbers = #tpu.dot_dimension_numbers<[1], [0], [0], [1], [0, 0, 1, 1], [], []>} : vector<2x16xf32>, vector<16x64xf32>, vector<2x64xf32> -> vector<2x64xf32>
    %268 = arith.addf %266, %267 : vector<2x64xf32>
    %269 = vector.extract_strided_slice %268 {offsets = [0, 0], sizes = [2, 16], strides = [1, 1]} : vector<2x64xf32> to vector<2x16xf32>
    %270 = arith.negf %269 : vector<2x16xf32>
    %271 = math.exp %270 : vector<2x16xf32>
    %cst_73 = arith.constant 1.000000e+00 : f32
    %272 = vector.broadcast %cst_73 : f32 to vector<2x16xf32>
    %273 = arith.addf %272, %271 : vector<2x16xf32>
    %274 = arith.divf %272, %273 : vector<2x16xf32>
    %275 = vector.extract_strided_slice %268 {offsets = [0, 16], sizes = [2, 16], strides = [1, 1]} : vector<2x64xf32> to vector<2x16xf32>
    %276 = arith.negf %275 : vector<2x16xf32>
    %277 = math.exp %276 : vector<2x16xf32>
    %cst_74 = arith.constant 1.000000e+00 : f32
    %278 = vector.broadcast %cst_74 : f32 to vector<2x16xf32>
    %279 = arith.addf %278, %277 : vector<2x16xf32>
    %280 = arith.divf %278, %279 : vector<2x16xf32>
    %281 = vector.extract_strided_slice %268 {offsets = [0, 32], sizes = [2, 16], strides = [1, 1]} : vector<2x64xf32> to vector<2x16xf32>
    %282 = math.tanh %281 : vector<2x16xf32>
    %283 = vector.extract_strided_slice %268 {offsets = [0, 48], sizes = [2, 16], strides = [1, 1]} : vector<2x64xf32> to vector<2x16xf32>
    %284 = arith.negf %283 : vector<2x16xf32>
    %285 = math.exp %284 : vector<2x16xf32>
    %cst_75 = arith.constant 1.000000e+00 : f32
    %286 = vector.broadcast %cst_75 : f32 to vector<2x16xf32>
    %287 = arith.addf %286, %285 : vector<2x16xf32>
    %288 = arith.divf %286, %287 : vector<2x16xf32>
    %289 = arith.mulf %280, %201 : vector<2x16xf32>
    %290 = arith.mulf %274, %282 : vector<2x16xf32>
    %291 = arith.addf %289, %290 : vector<2x16xf32>
    %292 = math.tanh %291 : vector<2x16xf32>
    %293 = arith.mulf %288, %292 : vector<2x16xf32>
    %294 = vector.shape_cast %263 : vector<2x1xi1> to vector<2x1xi1>
    %295 = vector.broadcast %294 : vector<2x1xi1> to vector<2x16xi1>
    %296 = arith.select %295, %293, %198 : vector<2x16xi1>, vector<2x16xf32>
    %297 = vector.shape_cast %263 : vector<2x1xi1> to vector<2x1xi1>
    %298 = vector.broadcast %297 : vector<2x1xi1> to vector<2x16xi1>
    %299 = arith.select %298, %291, %201 : vector<2x16xi1>, vector<2x16xf32>
    %cst_76 = arith.constant 0.000000e+00 : f32
    %300 = vector.shape_cast %263 : vector<2x1xi1> to vector<2x1xi1>
    %301 = vector.broadcast %300 : vector<2x1xi1> to vector<2x16xi1>
    %302 = vector.broadcast %cst_76 : f32 to vector<2x16xf32>
    %303 = arith.select %301, %293, %302 : vector<2x16xi1>, vector<2x16xf32>
    %304 = arith.index_cast %258 : i32 to index
    %c0_77 = arith.constant 0 : index
    %c0_78 = arith.constant 0 : index
    %305 = vector.load %arg7[%304, %c0_77, %c0_78] : memref<4x2x16xf32, #tpu.memory_space<vmem>>, vector<1x2x16xf32>
    %306 = vector.shape_cast %305 : vector<1x2x16xf32> to vector<2x16xf32>
    %307 = vector.shape_cast %303 : vector<2x16xf32> to vector<1x2x16xf32>
    tpu.vector_store %arg7[%304, %c0_77, %c0_78], %307 {strides = array<i32>} : memref<4x2x16xf32, #tpu.memory_space<vmem>>, vector<1x2x16xf32>,
    %c3_i32_79 = arith.constant 3 : i32
    %c4_i32_80 = arith.constant 4 : i32
    %308 = arith.muli %arg0, %c4_i32_80 : i32
    %309 = arith.addi %308, %c3_i32_79 : i32
    %310 = vector.broadcast %309 : i32 to vector<2x1xi32>
    %311 = arith.cmpi slt, %310, %3 : vector<2x1xi32>
    %312 = arith.index_cast %c3_i32_79 : i32 to index
    %c0_81 = arith.constant 0 : index
    %c0_82 = arith.constant 0 : index
    %313 = vector.load %arg2[%312, %c0_81, %c0_82] : memref<4x2x64xf32, #tpu.memory_space<vmem>>, vector<1x2x64xf32>
    %314 = vector.shape_cast %313 : vector<1x2x64xf32> to vector<2x64xf32>
    %cst_83 = arith.constant dense<0.000000e+00> : vector<2x64xf32>
    %315 = tpu.matmul %246, %4, %cst_83 {dimension_numbers = #tpu.dot_dimension_numbers<[1], [0], [0], [1], [0, 0, 1, 1], [], []>} : vector<2x16xf32>, vector<16x64xf32>, vector<2x64xf32> -> vector<2x64xf32>
    %316 = arith.addf %314, %315 : vector<2x64xf32>
    %317 = vector.extract_strided_slice %316 {offsets = [0, 0], sizes = [2, 16], strides = [1, 1]} : vector<2x64xf32> to vector<2x16xf32>
    %318 = arith.negf %317 : vector<2x16xf32>
    %319 = math.exp %318 : vector<2x16xf32>
    %cst_84 = arith.constant 1.000000e+00 : f32
    %320 = vector.broadcast %cst_84 : f32 to vector<2x16xf32>
    %321 = arith.addf %320, %319 : vector<2x16xf32>
    %322 = arith.divf %320, %321 : vector<2x16xf32>
    %323 = vector.extract_strided_slice %316 {offsets = [0, 16], sizes = [2, 16], strides = [1, 1]} : vector<2x64xf32> to vector<2x16xf32>
    %324 = arith.negf %323 : vector<2x16xf32>
    %325 = math.exp %324 : vector<2x16xf32>
    %cst_85 = arith.constant 1.000000e+00 : f32
    %326 = vector.broadcast %cst_85 : f32 to vector<2x16xf32>
    %327 = arith.addf %326, %325 : vector<2x16xf32>
    %328 = arith.divf %326, %327 : vector<2x16xf32>
    %329 = vector.extract_strided_slice %316 {offsets = [0, 32], sizes = [2, 16], strides = [1, 1]} : vector<2x64xf32> to vector<2x16xf32>
    %330 = math.tanh %329 : vector<2x16xf32>
    %331 = vector.extract_strided_slice %316 {offsets = [0, 48], sizes = [2, 16], strides = [1, 1]} : vector<2x64xf32> to vector<2x16xf32>
    %332 = arith.negf %331 : vector<2x16xf32>
    %333 = math.exp %332 : vector<2x16xf32>
    %cst_86 = arith.constant 1.000000e+00 : f32
    %334 = vector.broadcast %cst_86 : f32 to vector<2x16xf32>
    %335 = arith.addf %334, %333 : vector<2x16xf32>
    %336 = arith.divf %334, %335 : vector<2x16xf32>
    %337 = arith.mulf %328, %249 : vector<2x16xf32>
    %338 = arith.mulf %322, %330 : vector<2x16xf32>
    %339 = arith.addf %337, %338 : vector<2x16xf32>
    %340 = math.tanh %339 : vector<2x16xf32>
    %341 = arith.mulf %336, %340 : vector<2x16xf32>
    %342 = vector.shape_cast %311 : vector<2x1xi1> to vector<2x1xi1>
    %343 = vector.broadcast %342 : vector<2x1xi1> to vector<2x16xi1>
    %344 = arith.select %343, %341, %246 : vector<2x16xi1>, vector<2x16xf32>
    %345 = vector.shape_cast %311 : vector<2x1xi1> to vector<2x1xi1>
    %346 = vector.broadcast %345 : vector<2x1xi1> to vector<2x16xi1>
    %347 = arith.select %346, %339, %249 : vector<2x16xi1>, vector<2x16xf32>
    %cst_87 = arith.constant 0.000000e+00 : f32
    %348 = vector.shape_cast %311 : vector<2x1xi1> to vector<2x1xi1>
    %349 = vector.broadcast %348 : vector<2x1xi1> to vector<2x16xi1>
    %350 = vector.broadcast %cst_87 : f32 to vector<2x16xf32>
    %351 = arith.select %349, %341, %350 : vector<2x16xi1>, vector<2x16xf32>
    %352 = arith.index_cast %c3_i32_79 : i32 to index
    %c0_88 = arith.constant 0 : index
    %c0_89 = arith.constant 0 : index
    %353 = vector.load %arg6[%352, %c0_88, %c0_89] : memref<4x2x16xf32, #tpu.memory_space<vmem>>, vector<1x2x16xf32>
    %354 = vector.shape_cast %353 : vector<1x2x16xf32> to vector<2x16xf32>
    %355 = vector.shape_cast %351 : vector<2x16xf32> to vector<1x2x16xf32>
    tpu.vector_store %arg6[%352, %c0_88, %c0_89], %355 {strides = array<i32>} : memref<4x2x16xf32, #tpu.memory_space<vmem>>, vector<1x2x16xf32>,
    %c3_i32_90 = arith.constant 3 : i32
    %356 = arith.subi %c3_i32_90, %c3_i32_79 : i32
    %c1_i32_91 = arith.constant 1 : i32
    %357 = arith.subi %c1_i32_91, %arg0 : i32
    %c4_i32_92 = arith.constant 4 : i32
    %358 = arith.muli %357, %c4_i32_92 : i32
    %359 = arith.addi %358, %356 : i32
    %360 = vector.broadcast %359 : i32 to vector<2x1xi32>
    %361 = arith.cmpi slt, %360, %3 : vector<2x1xi32>
    %362 = arith.index_cast %356 : i32 to index
    %c0_93 = arith.constant 0 : index
    %c0_94 = arith.constant 0 : index
    %363 = vector.load %arg3[%362, %c0_93, %c0_94] : memref<4x2x64xf32, #tpu.memory_space<vmem>>, vector<1x2x64xf32>
    %364 = vector.shape_cast %363 : vector<1x2x64xf32> to vector<2x64xf32>
    %cst_95 = arith.constant dense<0.000000e+00> : vector<2x64xf32>
    %365 = tpu.matmul %296, %5, %cst_95 {dimension_numbers = #tpu.dot_dimension_numbers<[1], [0], [0], [1], [0, 0, 1, 1], [], []>} : vector<2x16xf32>, vector<16x64xf32>, vector<2x64xf32> -> vector<2x64xf32>
    %366 = arith.addf %364, %365 : vector<2x64xf32>
    %367 = vector.extract_strided_slice %366 {offsets = [0, 0], sizes = [2, 16], strides = [1, 1]} : vector<2x64xf32> to vector<2x16xf32>
    %368 = arith.negf %367 : vector<2x16xf32>
    %369 = math.exp %368 : vector<2x16xf32>
    %cst_96 = arith.constant 1.000000e+00 : f32
    %370 = vector.broadcast %cst_96 : f32 to vector<2x16xf32>
    %371 = arith.addf %370, %369 : vector<2x16xf32>
    %372 = arith.divf %370, %371 : vector<2x16xf32>
    %373 = vector.extract_strided_slice %366 {offsets = [0, 16], sizes = [2, 16], strides = [1, 1]} : vector<2x64xf32> to vector<2x16xf32>
    %374 = arith.negf %373 : vector<2x16xf32>
    %375 = math.exp %374 : vector<2x16xf32>
    %cst_97 = arith.constant 1.000000e+00 : f32
    %376 = vector.broadcast %cst_97 : f32 to vector<2x16xf32>
    %377 = arith.addf %376, %375 : vector<2x16xf32>
    %378 = arith.divf %376, %377 : vector<2x16xf32>
    %379 = vector.extract_strided_slice %366 {offsets = [0, 32], sizes = [2, 16], strides = [1, 1]} : vector<2x64xf32> to vector<2x16xf32>
    %380 = math.tanh %379 : vector<2x16xf32>
    %381 = vector.extract_strided_slice %366 {offsets = [0, 48], sizes = [2, 16], strides = [1, 1]} : vector<2x64xf32> to vector<2x16xf32>
    %382 = arith.negf %381 : vector<2x16xf32>
    %383 = math.exp %382 : vector<2x16xf32>
    %cst_98 = arith.constant 1.000000e+00 : f32
    %384 = vector.broadcast %cst_98 : f32 to vector<2x16xf32>
    %385 = arith.addf %384, %383 : vector<2x16xf32>
    %386 = arith.divf %384, %385 : vector<2x16xf32>
    %387 = arith.mulf %378, %299 : vector<2x16xf32>
    %388 = arith.mulf %372, %380 : vector<2x16xf32>
    %389 = arith.addf %387, %388 : vector<2x16xf32>
    %390 = math.tanh %389 : vector<2x16xf32>
    %391 = arith.mulf %386, %390 : vector<2x16xf32>
    %392 = vector.shape_cast %361 : vector<2x1xi1> to vector<2x1xi1>
    %393 = vector.broadcast %392 : vector<2x1xi1> to vector<2x16xi1>
    %394 = arith.select %393, %391, %296 : vector<2x16xi1>, vector<2x16xf32>
    %395 = vector.shape_cast %361 : vector<2x1xi1> to vector<2x1xi1>
    %396 = vector.broadcast %395 : vector<2x1xi1> to vector<2x16xi1>
    %397 = arith.select %396, %389, %299 : vector<2x16xi1>, vector<2x16xf32>
    %cst_99 = arith.constant 0.000000e+00 : f32
    %398 = vector.shape_cast %361 : vector<2x1xi1> to vector<2x1xi1>
    %399 = vector.broadcast %398 : vector<2x1xi1> to vector<2x16xi1>
    %400 = vector.broadcast %cst_99 : f32 to vector<2x16xf32>
    %401 = arith.select %399, %391, %400 : vector<2x16xi1>, vector<2x16xf32>
    %402 = arith.index_cast %356 : i32 to index
    %c0_100 = arith.constant 0 : index
    %c0_101 = arith.constant 0 : index
    %403 = vector.load %arg7[%402, %c0_100, %c0_101] : memref<4x2x16xf32, #tpu.memory_space<vmem>>, vector<1x2x16xf32>
    %404 = vector.shape_cast %403 : vector<1x2x16xf32> to vector<2x16xf32>
    %405 = vector.shape_cast %401 : vector<2x16xf32> to vector<1x2x16xf32>
    tpu.vector_store %arg7[%402, %c0_100, %c0_101], %405 {strides = array<i32>} : memref<4x2x16xf32, #tpu.memory_space<vmem>>, vector<1x2x16xf32>,
    %c4_i32_102 = arith.constant 4 : i32
    %c0_103 = arith.constant 0 : index
    %c0_104 = arith.constant 0 : index
    %c0_105 = arith.constant 0 : index
    %406 = vector.load %arg8[%c0_103, %c0_104, %c0_105] : memref<4x2x16xf32, #tpu.memory_space<vmem>>, vector<1x2x16xf32>
    %407 = vector.shape_cast %406 : vector<1x2x16xf32> to vector<2x16xf32>
    %408 = vector.shape_cast %344 : vector<2x16xf32> to vector<1x2x16xf32>
    tpu.vector_store %arg8[%c0_103, %c0_104, %c0_105], %408 {strides = array<i32>} : memref<4x2x16xf32, #tpu.memory_space<vmem>>, vector<1x2x16xf32>,
    %c1_106 = arith.constant 1 : index
    %c0_107 = arith.constant 0 : index
    %c0_108 = arith.constant 0 : index
    %409 = vector.load %arg8[%c1_106, %c0_107, %c0_108] : memref<4x2x16xf32, #tpu.memory_space<vmem>>, vector<1x2x16xf32>
    %410 = vector.shape_cast %409 : vector<1x2x16xf32> to vector<2x16xf32>
    %411 = vector.shape_cast %347 : vector<2x16xf32> to vector<1x2x16xf32>
    tpu.vector_store %arg8[%c1_106, %c0_107, %c0_108], %411 {strides = array<i32>} : memref<4x2x16xf32, #tpu.memory_space<vmem>>, vector<1x2x16xf32>,
    %c2_109 = arith.constant 2 : index
    %c0_110 = arith.constant 0 : index
    %c0_111 = arith.constant 0 : index
    %412 = vector.load %arg8[%c2_109, %c0_110, %c0_111] : memref<4x2x16xf32, #tpu.memory_space<vmem>>, vector<1x2x16xf32>
    %413 = vector.shape_cast %412 : vector<1x2x16xf32> to vector<2x16xf32>
    %414 = vector.shape_cast %394 : vector<2x16xf32> to vector<1x2x16xf32>
    tpu.vector_store %arg8[%c2_109, %c0_110, %c0_111], %414 {strides = array<i32>} : memref<4x2x16xf32, #tpu.memory_space<vmem>>, vector<1x2x16xf32>,
    %c3_112 = arith.constant 3 : index
    %c0_113 = arith.constant 0 : index
    %c0_114 = arith.constant 0 : index
    %415 = vector.load %arg8[%c3_112, %c0_113, %c0_114] : memref<4x2x16xf32, #tpu.memory_space<vmem>>, vector<1x2x16xf32>
    %416 = vector.shape_cast %415 : vector<1x2x16xf32> to vector<2x16xf32>
    %417 = vector.shape_cast %397 : vector<2x16xf32> to vector<1x2x16xf32>
    tpu.vector_store %arg8[%c3_112, %c0_113, %c0_114], %417 {strides = array<i32>} : memref<4x2x16xf32, #tpu.memory_space<vmem>>, vector<1x2x16xf32>,
    return
  }
  func.func @transform_0(%arg0: i32) -> (i32, i32) {
    %c0_i32 = arith.constant 0 : i32
    %c0_i32_0 = arith.constant 0 : i32
    %c0_i32_1 = arith.constant 0 : i32
    return %c0_i32, %c0_i32_0 : i32, i32
  }
  func.func @transform_1(%arg0: i32) -> (i32, i32, i32) {
    %c0_i32 = arith.constant 0 : i32
    %c0_i32_0 = arith.constant 0 : i32
    %c0_i32_1 = arith.constant 0 : i32
    return %arg0, %c0_i32, %c0_i32_0 : i32, i32, i32
  }
  func.func @transform_2(%arg0: i32) -> (i32, i32, i32) {
    %c1_i32 = arith.constant 1 : i32
    %0 = arith.subi %c1_i32, %arg0 : i32
    %c0_i32 = arith.constant 0 : i32
    %c0_i32_0 = arith.constant 0 : i32
    %c0_i32_1 = arith.constant 0 : i32
    return %0, %c0_i32, %c0_i32_0 : i32, i32, i32
  }
  func.func @transform_3(%arg0: i32) -> (i32, i32) {
    %c0_i32 = arith.constant 0 : i32
    %c0_i32_0 = arith.constant 0 : i32
    %c0_i32_1 = arith.constant 0 : i32
    return %c0_i32, %c0_i32_0 : i32, i32
  }
  func.func @transform_4(%arg0: i32) -> (i32, i32) {
    %c0_i32 = arith.constant 0 : i32
    %c0_i32_0 = arith.constant 0 : i32
    %c0_i32_1 = arith.constant 0 : i32
    return %c0_i32, %c0_i32_0 : i32, i32
  }
  func.func @transform_5(%arg0: i32) -> (i32, i32, i32) {
    %c0_i32 = arith.constant 0 : i32
    %c0_i32_0 = arith.constant 0 : i32
    %c0_i32_1 = arith.constant 0 : i32
    return %arg0, %c0_i32, %c0_i32_0 : i32, i32, i32
  }
  func.func @transform_6(%arg0: i32) -> (i32, i32, i32) {
    %c1_i32 = arith.constant 1 : i32
    %0 = arith.subi %c1_i32, %arg0 : i32
    %c0_i32 = arith.constant 0 : i32
    %c0_i32_0 = arith.constant 0 : i32
    %c0_i32_1 = arith.constant 0 : i32
    return %0, %c0_i32, %c0_i32_0 : i32, i32, i32
  }
}

</mosaic_0001>

<llo_original>
// kernel: _lambda_.1
$region0: #{_lambda_.1}
  #allocation0 [shape = 'u32[]', space=smem, size = 0x4, offset = 0x4, fixed_abs, tag = 'smem constant byte address 0x4 - core index']
  #allocation1 [shape = 'u32[72,128]{1,0:T(1,128)}', space=vmem, size = 0x9000, scoped, tag = 'internal scratch']
  #allocation2 [shape = 'f32[4,2,16]{2,1,0:T(2,128)}', space=vmem, size = 0x1000, scoped, tag = 'scratch operand']
  %s0 = inlined_call_operand.vmem [shape: s32[2,1], index: 0, kind: input, shape index: {}]
  %s1 = inlined_call_operand.vmem [shape: f32[8,2,64], index: 1, kind: input, shape index: {}]
  %s2 = inlined_call_operand.vmem [shape: f32[8,2,64], index: 2, kind: input, shape index: {}]
  %s3 = inlined_call_operand.vmem [shape: f32[16,64], index: 3, kind: input, shape index: {}]
  %s4 = inlined_call_operand.vmem [shape: f32[16,64], index: 4, kind: input, shape index: {}]
  %s5 = inlined_call_operand.vmem [shape: f32[8,2,16], index: 5, kind: output, shape index: {0}]
  %s6 = inlined_call_operand.vmem [shape: f32[8,2,16], index: 6, kind: output, shape index: {1}]
  %7 = xla_tuple %s5, %s6
  %s8 = sld [smem:[#allocation0]]
  $region65: #{_lambda_.1} parent=0
    _
  %s10 = ssub.s32 1, %s8
  %s11 = scalar_select 0, %s10, %s8
  loop: start=0, step=1, limit=4
  $region2: #{_lambda_.1} parent=0 // loop_pre_header
    _
  $region3: #{_lambda_.1} parent=0 // loop_header
    %s13 = sphi 0, %s17
    %p14 = scmp.ge.s32.totalorder %s13, 4
    %s21 = sphi 0, %s21
    %s23 = sphi 0, %s21
    %s24 = sphi 0, %s23
    %s38 = sphi 0, %s24
    %s44 = sphi 0, %s46
    %s47 = sphi 0, %s44
    %s48 = sphi 0, %s47
    %s64 = sphi 0, %s48
    %s72 = sphi 0, %s74
    %s75 = sphi 0, %s72
    %s76 = sphi 0, %s75
    %s92 = sphi 0, %s76
    %s96 = sphi 0, %s96
    %s98 = sphi 0, %s96
    %s99 = sphi 0, %s98
    %s113 = sphi 0, %s99
    %s117 = sphi 0, %s117
    %s119 = sphi 0, %s117
    %s120 = sphi 0, %s119
    %s134 = sphi 0, %s120
    %s140 = sphi 0, %s142
    %s143 = sphi 0, %s140
    %s144 = sphi 0, %s143
    %s160 = sphi 0, %s144
    %s168 = sphi 0, %s170
    %s171 = sphi 0, %s168
    %s172 = sphi 0, %s171
    %s188 = sphi 0, %s172
  $region4: #{_lambda_.1} parent=0 // loop_header_branch
    %16 = sbr.rel (%p14) target = $region8
  $region5: #{_lambda_.1} parent=0 // loop_body
    %s18 = ssub.s32 %s13, 1
    %s19 = ssub.s32 %s13, 2
    %s20 = sadd.s32 %s13, 1
    %s22 = sadd.s32 %s21, 1
    %p25 = scmp.eq.s32.totalorder %s13, 1
    %p26 = scmp.ne.s32.totalorder %s21, %s23
    %p27 = scmp.eq.s32.totalorder %s13, 0
    %p28 = por %p26, %p27
    %p29 = scmp.ne.s32.totalorder %s21, %s23
    %p30 = scmp.eq.s32.totalorder %s18, 1
    %p31 = por %p29, %p30
    %p32 = scmp.ne.s32.totalorder %s23, %s24
    %p33 = scmp.eq.s32.totalorder %s18, 0
    %p34 = por %p32, %p33
    %p35 = scmp.ne.s32.totalorder %s23, %s24
    %p36 = scmp.eq.s32.totalorder %s19, 1
    %p37 = por %p35, %p36
    %p39 = scmp.ne.s32.totalorder %s24, %s38
    %p40 = scmp.eq.s32.totalorder %s19, 0
    %p41 = por %p39, %p40
    %s42 = ssub.s32 %s13, %s20
    %p43 = scmp.eq.s32.totalorder %s42, 0
    %s45 = sadd.s32 %s44, 1
    %s46 = scalar_select %p43, %s44, %s45
    %p49 = pneg %p43
    %p50 = scmp.eq.s32.totalorder %s13, 1
    %p51 = por %p49, %p50
    %p52 = scmp.ne.s32.totalorder %s44, %s47
    %p53 = scmp.eq.s32.totalorder %s13, 0
    %p54 = por %p52, %p53
    %p55 = scmp.ne.s32.totalorder %s44, %s47
    %p56 = scmp.eq.s32.totalorder %s18, 1
    %p57 = por %p55, %p56
    %p58 = scmp.ne.s32.totalorder %s47, %s48
    %p59 = scmp.eq.s32.totalorder %s18, 0
    %p60 = por %p58, %p59
    %p61 = scmp.ne.s32.totalorder %s47, %s48
    %p62 = scmp.eq.s32.totalorder %s19, 1
    %p63 = por %p61, %p62
    %p65 = scmp.ne.s32.totalorder %s48, %s64
    %p66 = scmp.eq.s32.totalorder %s19, 0
    %p67 = por %p65, %p66
    %s68 = ssub.s32 1, %s13
    %s69 = ssub.s32 1, %s20
    %s70 = ssub.s32 %s68, %s69
    %p71 = scmp.eq.s32.totalorder %s70, 0
    %s73 = sadd.s32 %s72, 1
    %s74 = scalar_select %p71, %s72, %s73
    %p77 = pneg %p71
    %p78 = scmp.eq.s32.totalorder %s13, 1
    %p79 = por %p77, %p78
    %p80 = scmp.ne.s32.totalorder %s72, %s75
    %p81 = scmp.eq.s32.totalorder %s13, 0
    %p82 = por %p80, %p81
    %p83 = scmp.ne.s32.totalorder %s72, %s75
    %p84 = scmp.eq.s32.totalorder %s18, 1
    %p85 = por %p83, %p84
    %p86 = scmp.ne.s32.totalorder %s75, %s76
    %p87 = scmp.eq.s32.totalorder %s18, 0
    %p88 = por %p86, %p87
    %p89 = scmp.ne.s32.totalorder %s75, %s76
    %p90 = scmp.eq.s32.totalorder %s19, 1
    %p91 = por %p89, %p90
    %p93 = scmp.ne.s32.totalorder %s76, %s92
    %p94 = scmp.eq.s32.totalorder %s19, 0
    %p95 = por %p93, %p94
    %s97 = sadd.s32 %s96, 1
    %p100 = scmp.eq.s32.totalorder %s13, 1
    %p101 = scmp.ne.s32.totalorder %s96, %s98
    %p102 = scmp.eq.s32.totalorder %s13, 0
    %p103 = por %p101, %p102
    %p104 = scmp.ne.s32.totalorder %s96, %s98
    %p105 = scmp.eq.s32.totalorder %s18, 1
    %p106 = por %p104, %p105
    %p107 = scmp.ne.s32.totalorder %s98, %s99
    %p108 = scmp.eq.s32.totalorder %s18, 0
    %p109 = por %p107, %p108
    %p110 = scmp.ne.s32.totalorder %s98, %s99
    %p111 = scmp.eq.s32.totalorder %s19, 1
    %p112 = por %p110, %p111
    %p114 = scmp.ne.s32.totalorder %s99, %s113
    %p115 = scmp.eq.s32.totalorder %s19, 0
    %p116 = por %p114, %p115
    %s118 = sadd.s32 %s117, 1
    %p121 = scmp.eq.s32.totalorder %s13, 1
    %p122 = scmp.ne.s32.totalorder %s117, %s119
    %p123 = scmp.eq.s32.totalorder %s13, 0
    %p124 = por %p122, %p123
    %p125 = scmp.ne.s32.totalorder %s117, %s119
    %p126 = scmp.eq.s32.totalorder %s18, 1
    %p127 = por %p125, %p126
    %p128 = scmp.ne.s32.totalorder %s119, %s120
    %p129 = scmp.eq.s32.totalorder %s18, 0
    %p130 = por %p128, %p129
    %p131 = scmp.ne.s32.totalorder %s119, %s120
    %p132 = scmp.eq.s32.totalorder %s19, 1
    %p133 = por %p131, %p132
    %p135 = scmp.ne.s32.totalorder %s120, %s134
    %p136 = scmp.eq.s32.totalorder %s19, 0
    %p137 = por %p135, %p136
    %s138 = ssub.s32 %s13, %s20
    %p139 = scmp.eq.s32.totalorder %s138, 0
    %s141 = sadd.s32 %s140, 1
    %s142 = scalar_select %p139, %s140, %s141
    %p145 = pneg %p139
    %p146 = scmp.eq.s32.totalorder %s13, 1
    %p147 = por %p145, %p146
    %p148 = scmp.ne.s32.totalorder %s140, %s143
    %p149 = scmp.eq.s32.totalorder %s13, 0
    %p150 = por %p148, %p149
    %p151 = scmp.ne.s32.totalorder %s140, %s143
    %p152 = scmp.eq.s32.totalorder %s18, 1
    %p153 = por %p151, %p152
    %p154 = scmp.ne.s32.totalorder %s143, %s144
    %p155 = scmp.eq.s32.totalorder %s18, 0
    %p156 = por %p154, %p155
    %p157 = scmp.ne.s32.totalorder %s143, %s144
    %p158 = scmp.eq.s32.totalorder %s19, 1
    %p159 = por %p157, %p158
    %p161 = scmp.ne.s32.totalorder %s144, %s160
    %p162 = scmp.eq.s32.totalorder %s19, 0
    %p163 = por %p161, %p162
    %s164 = ssub.s32 1, %s13
    %s165 = ssub.s32 1, %s20
    %s166 = ssub.s32 %s164, %s165
    %p167 = scmp.eq.s32.totalorder %s166, 0
    %s169 = sadd.s32 %s168, 1
    %s170 = scalar_select %p167, %s168, %s169
    %p173 = pneg %p167
    %p174 = scmp.eq.s32.totalorder %s13, 1
    %p175 = por %p173, %p174
    %p176 = scmp.ne.s32.totalorder %s168, %s171
    %p177 = scmp.eq.s32.totalorder %s13, 0
    %p178 = por %p176, %p177
    %p179 = scmp.ne.s32.totalorder %s168, %s171
    %p180 = scmp.eq.s32.totalorder %s18, 1
    %p181 = por %p179, %p180
    %p182 = scmp.ne.s32.totalorder %s171, %s172
    %p183 = scmp.eq.s32.totalorder %s18, 0
    %p184 = por %p182, %p183
    %p185 = scmp.ne.s32.totalorder %s171, %s172
    %p186 = scmp.eq.s32.totalorder %s19, 1
    %p187 = por %p185, %p186
    %p189 = scmp.ne.s32.totalorder %s172, %s188
    %p190 = scmp.eq.s32.totalorder %s19, 0
    %p191 = por %p189, %p190
    %p192 = scmp.le.s32.totalorder 1, %s13
    %p193 = scmp.lt.s32.totalorder %s13, 3
    %p194 = pnand %p192, %p193
    %p195 = pneg %p194
    // Predicated region
    $region9: #{_lambda_.1} parent=5 // pred_check
      _
    $region10: #{_lambda_.1} parent=5 // pred_check_branch
      %197 = sbr.rel (%p194) target = $region12
    $region11: #{_lambda_.1} parent=5 // pred_region
      %s198 = ssub.s32 %s13, 1
      // Predicated region
      $region13: #{_lambda_.1} parent=11 // pred_check
        %p199 = pneg %p34
      $region14: #{_lambda_.1} parent=11 // pred_check_branch
        %201 = sbr.rel (%p199) target = $region16
      $region15: #{_lambda_.1} parent=11 // pred_region
        _
      $region16: #{_lambda_.1} parent=11 // pred_fallthru
        _
      // Predicated region
      $region17: #{_lambda_.1} parent=11 // pred_check
        %p202 = pneg %p109
      $region18: #{_lambda_.1} parent=11 // pred_check_branch
        %204 = sbr.rel (%p202) target = $region20
      $region19: #{_lambda_.1} parent=11 // pred_region
        _
      $region20: #{_lambda_.1} parent=11 // pred_fallthru
        _
      // Predicated region
      $region21: #{_lambda_.1} parent=11 // pred_check
        %p205 = pneg %p130
      $region22: #{_lambda_.1} parent=11 // pred_check_branch
        %207 = sbr.rel (%p205) target = $region24
      $region23: #{_lambda_.1} parent=11 // pred_region
        _
      $region24: #{_lambda_.1} parent=11 // pred_fallthru
        _
    $region12: #{_lambda_.1} parent=5 // pred_fallthru
      _
    %p208 = scmp.lt.s32.totalorder %s13, 2
    // Predicated region
    $region25: #{_lambda_.1} parent=5 // pred_check
      %p209 = pneg %p208
    $region26: #{_lambda_.1} parent=5 // pred_check_branch
      %211 = sbr.rel (%p209) target = $region28
    $region27: #{_lambda_.1} parent=5 // pred_region
      // Predicated region
      $region29: #{_lambda_.1} parent=27 // pred_check
        %p212 = pneg %p54
      $region30: #{_lambda_.1} parent=27 // pred_check_branch
        %214 = sbr.rel (%p212) target = $region32
      $region31: #{_lambda_.1} parent=27 // pred_region
        %s215 = smul.u32 4, %s13
        %p216 = scmp.lt.s32.totalorder %s215, 7
        %s217 = scalar_select %p216, %s215, 7
        %s218 = smul.addr %s217, 2
        %s219 = scalar_lea.vmem %s1, %s218
        %s220 = smul.u32 4, %s13
      $region32: #{_lambda_.1} parent=27 // pred_fallthru
        _
      // Predicated region
      $region33: #{_lambda_.1} parent=27 // pred_check
        %p221 = pneg %p82
      $region34: #{_lambda_.1} parent=27 // pred_check_branch
        %223 = sbr.rel (%p221) target = $region36
      $region35: #{_lambda_.1} parent=27 // pred_region
        %s224 = ssub.s32 1, %s13
        %s225 = smul.u32 4, %s224
        %p226 = scmp.lt.s32.totalorder %s225, 7
        %s227 = scalar_select %p226, %s225, 7
        %s228 = smul.addr %s227, 2
        %s229 = scalar_lea.vmem %s2, %s228
        %s230 = ssub.s32 1, %s13
        %s231 = smul.u32 4, %s230
      $region36: #{_lambda_.1} parent=27 // pred_fallthru
        _
    $region28: #{_lambda_.1} parent=5 // pred_fallthru
      _
    %p232 = scmp.le.s32.totalorder 1, %s13
    %p233 = scmp.lt.s32.totalorder %s13, 3
    %p234 = pnand %p232, %p233
    %p235 = pneg %p234
    // Predicated region
    $region37: #{_lambda_.1} parent=5 // pred_check
      _
    $region38: #{_lambda_.1} parent=5 // pred_check_branch
      %237 = sbr.rel (%p234) target = $region40
    $region39: #{_lambda_.1} parent=5 // pred_region
      %s238 = ssub.s32 %s13, 1
      %p239 = pneg %p34
      %p240 = pneg %p31
      %s241 = smul.u32 4, %s18
      %p242 = scmp.lt.s32.totalorder %s241, 7
      %s243 = scalar_select %p242, %s241, 7
      %s244 = smul.addr %s243, 2
      %s245 = scalar_lea.vmem %s1, %s244
      %p246 = pneg %p60
      %p247 = pneg %p57
      %s248 = ssub.s32 1, %s18
      %s249 = smul.u32 4, %s248
      %p250 = scmp.lt.s32.totalorder %s249, 7
      %s251 = scalar_select %p250, %s249, 7
      %s252 = smul.addr %s251, 2
      %s253 = scalar_lea.vmem %s2, %s252
      %p254 = pneg %p88
      %p255 = pneg %p85
      %p256 = pneg %p109
      %p257 = pneg %p106
      %p258 = pneg %p130
      %p259 = pneg %p127
      %p260 = pneg %p156
      %p261 = pneg %p153
      %s262 = smul.u32 4, %s18
      %p263 = scmp.lt.s32.totalorder %s262, 7
      %s264 = scalar_select %p263, %s262, 7
      %s265 = smul.addr %s264, 2
      %s266 = scalar_lea.vmem %s5, %s265
      %p267 = pneg %p184
      %p268 = pneg %p181
      %s269 = ssub.s32 1, %s18
      %s270 = smul.u32 4, %s269
      %p271 = scmp.lt.s32.totalorder %s270, 7
      %s272 = scalar_select %p271, %s270, 7
      %s273 = smul.addr %s272, 2
      %s274 = scalar_lea.vmem %s6, %s273
      %s275 = smul.u32 4, %s18
      %p276 = scmp.lt.s32.totalorder %s275, 7
      %s277 = scalar_select %p276, %s275, 7
      %s278 = smul.addr %s277, 2
      %s279 = scalar_lea.vmem %s1, %s278
      %s280 = smul.u32 4, %s18
      %s281 = ssub.s32 1, %s18
      %s282 = smul.u32 4, %s281
      %p283 = scmp.lt.s32.totalorder %s282, 7
      %s284 = scalar_select %p283, %s282, 7
      %s285 = smul.addr %s284, 2
      %s286 = scalar_lea.vmem %s2, %s285
      %s287 = ssub.s32 1, %s18
      %s288 = smul.u32 4, %s287
      %s289 = smul.u32 4, %s18
      %p290 = scmp.lt.s32.totalorder %s289, 7
      %s291 = scalar_select %p290, %s289, 7
      %s292 = smul.addr %s291, 2
      %s293 = scalar_lea.vmem %s5, %s292
      %s294 = smul.u32 4, %s18
      %s295 = ssub.s32 1, %s18
      %s296 = smul.u32 4, %s295
      %p297 = scmp.lt.s32.totalorder %s296, 7
      %s298 = scalar_select %p297, %s296, 7
      %s299 = smul.addr %s298, 2
      %s300 = scalar_lea.vmem %s6, %s299
      %s301 = ssub.s32 1, %s18
      %s302 = smul.u32 4, %s301
      %p303 = scmp.eq.s32.totalorder %s18, 0
      // Predicated region
      $region41: #{_lambda_.1} parent=39 // pred_check
        %p304 = pneg %p303
      $region42: #{_lambda_.1} parent=39 // pred_check_branch
        %306 = sbr.rel (%p304) target = $region44
      $region43: #{_lambda_.1} parent=39 // pred_region
        %vm307 = vcmask 123904
        %308 = vst.msk [vmem:[#allocation2] sm:$0x3] %vm307, 0.0
        %309 = vst.msk [vmem:[#allocation2 + $0x2] sm:$0x3] %vm307, 0.0
        %310 = vst.msk [vmem:[#allocation2 + $0x4] sm:$0x3] %vm307, 0.0
        %311 = vst.msk [vmem:[#allocation2 + $0x6] sm:$0x3] %vm307, 0.0
      $region44: #{_lambda_.1} parent=39 // pred_fallthru
        _
      %v312 = vld [vmem:[%s0] sm:$0x3]
      %v313 = vld [vmem:[%s3] sm:$0xff]
      %v314 = vld [vmem:[%s3 + $0x8] sm:$0xff]
      %v315 = vld [vmem:[%s4] sm:$0xff]
      %v316 = vld [vmem:[%s4 + $0x8] sm:$0xff]
      %v317 = vld [vmem:[#allocation2] sm:$0x3]
      %s318 = scalar_lea.vmem [#allocation2], 2
      %v319 = vld [vmem:[%s318] sm:$0x3]
      %s320 = scalar_lea.vmem [#allocation2], 4
      %v321 = vld [vmem:[%s320] sm:$0x3]
      %s322 = scalar_lea.vmem [#allocation2], 6
      %v323 = vld [vmem:[%s322] sm:$0x3]
      %s324 = smul.u32 %s18, 4
      %v325 = vstv %s324
      %vm326 = vcmp.lt.s32.totalorder %v325, %v312
      %v327 = vld [vmem:[%s279] sm:$0x3]
      %vm328 = vcmask 130048
      %v330 = vsel %vm328, %v317, 0
      %332 = vmatpush.msra.mxu0 0.0
      %333 = vmatpush.msra.mxu0 0.0
      %334 = vmatpush.msra.mxu0 0.0
      %335 = vmatpush.msra.mxu0 0.0
      %336 = vmatpush.msra.mxu0 0.0
      %337 = vmatpush.msra.mxu0 0.0
      %338 = vmatpush.msra.mxu0 0.0
      %339 = vmatpush.msra.mxu0 0.0
      %340 = vmatpush.msra.mxu0 0.0
      %341 = vmatpush.msra.mxu0 0.0
      %342 = vmatpush.msra.mxu0 0.0
      %343 = vmatpush.msra.mxu0 0.0
      %344 = vmatpush.msra.mxu0 0.0
      %345 = vmatpush.msra.mxu0 0.0
      %346 = vmatpush.msra.mxu0 %v314
      %347 = vmatpush.msra.mxu0 %v313
      %348 = vmatmul.f32.gmra.mxu0 %v330
      %v349 = vpop.f32.mrf.mxu0
      %v350 = vadd.f32 0.0, %v349
      %351 = vdwg.mxu0
      %v352 = vadd.f32 %v327, %v350
      %v353 = vxor.u32 %v352, 2147483648
      %v354 = vmul.f32 %v353, 1.442695
      %v355 = vpow.pop %v354
      %v356 = vadd.f32 %v355, 1.0
      %v357 = vrcp.pop %v356
      %v358 = vmul.f32 %v356, %v357
      %v359 = vsub.f32 1.0, %v358
      %v360 = vmul.f32 %v357, %v359
      %v361 = vadd.f32 %v357, %v360
      %vm362 = vweird.f32 %v356
      %vm363 = vweird.f32 %v357
      %vm364 = vmor %vm362, %vm363
      %v365 = vsel %vm364, %v357, %v361
      %v366 = vand.u32 2147483647, %v356
      %vm367 = vcmp.eq.f32.partialorder %v366, 8.507059e+37
      %v368 = vand.u32 %v356, 2147483648
      %v369 = vor.u32 1.1754944e-38, %v368
      %v370 = vsel %vm367, %v369, %v365
      %v371 = vmul.f32 1.0, %v370
      %v372 = vtanh.pop %v352
      %374 = vrot.lane.b32.xlu0 %v319, 16
      %v375 = vpop.permute.xlu0 %374
      %v377 = vmul.f32 %v371, %v375
      %379 = vrot.lane.b32.xlu0 %v372, 96
      %v380 = vpop.permute.xlu0 %379
      %v382 = vmul.f32 %v371, %v380
      %384 = vrot.lane.b32.xlu0 %v382, 16
      %v385 = vpop.permute.xlu0 %384
      %v387 = vadd.f32 %v377, %v385
      %v388 = vtanh.pop %v387
      %390 = vrot.lane.b32.xlu0 %v388, 32
      %v391 = vpop.permute.xlu0 %390
      %v393 = vmul.f32 %v371, %v391
      %v394 = vsel %vm326, 1, 0
      %395 = vset.pattern.permute.xlu0 0
      %396 = vperm.xlu0 %395, %v394
      %v397 = vpop.permute.xlu0 %396
      %vm398 = vcmp.eq.s32.totalorder %v397, 1
      %399 = vrot.lane.b32.xlu0 %v317, 48
      %v400 = vpop.permute.xlu0 %399
      %v402 = vsel %vm398, %v393, %v400
      %v403 = vsel %vm398, %v387, %v375
      %v404 = vsel %vm398, %v393, 0.0
      %406 = vrot.lane.b32.xlu0 %v404, 80
      %v407 = vpop.permute.xlu0 %406
      %vm409 = vcmask 123904
      %410 = vst.msk [vmem:[%s293] sm:$0x3] %vm409, %v407
      %s411 = ssub.s32 1, %s18
      %s412 = smul.u32 %s411, 4
      %s413 = sadd.s32 %s412, 3
      %v414 = vstv %s413
      %vm415 = vcmp.lt.s32.totalorder %v414, %v312
      %s416 = scalar_lea.vmem %s286, 6
      %v417 = vld [vmem:[%s416] sm:$0x3]
      %v419 = vsel %vm328, %v321, 0
      %421 = vmatpush.msra.mxu0 0.0
      %422 = vmatpush.msra.mxu0 0.0
      %423 = vmatpush.msra.mxu0 0.0
      %424 = vmatpush.msra.mxu0 0.0
      %425 = vmatpush.msra.mxu0 0.0
      %426 = vmatpush.msra.mxu0 0.0
      %427 = vmatpush.msra.mxu0 0.0
      %428 = vmatpush.msra.mxu0 0.0
      %429 = vmatpush.msra.mxu0 0.0
      %430 = vmatpush.msra.mxu0 0.0
      %431 = vmatpush.msra.mxu0 0.0
      %432 = vmatpush.msra.mxu0 0.0
      %433 = vmatpush.msra.mxu0 0.0
      %434 = vmatpush.msra.mxu0 0.0
      %435 = vmatpush.msra.mxu0 %v316
      %436 = vmatpush.msra.mxu0 %v315
      %437 = vmatmul.f32.gmra.mxu0 %v419
      %v438 = vpop.f32.mrf.mxu0
      %v439 = vadd.f32 0.0, %v438
      %440 = vdwg.mxu0
      %v441 = vadd.f32 %v417, %v439
      %v442 = vxor.u32 %v441, 2147483648
      %v443 = vmul.f32 %v442, 1.442695
      %v444 = vpow.pop %v443
      %v445 = vadd.f32 %v444, 1.0
      %v446 = vrcp.pop %v445
      %v447 = vmul.f32 %v445, %v446
      %v448 = vsub.f32 1.0, %v447
      %v449 = vmul.f32 %v446, %v448
      %v450 = vadd.f32 %v446, %v449
      %vm451 = vweird.f32 %v445
      %vm452 = vweird.f32 %v446
      %vm453 = vmor %vm451, %vm452
      %v454 = vsel %vm453, %v446, %v450
      %v455 = vand.u32 2147483647, %v445
      %vm456 = vcmp.eq.f32.partialorder %v455, 8.507059e+37
      %v457 = vand.u32 %v445, 2147483648
      %v458 = vor.u32 1.1754944e-38, %v457
      %v459 = vsel %vm456, %v458, %v454
      %v460 = vmul.f32 1.0, %v459
      %v461 = vtanh.pop %v441
      %463 = vrot.lane.b32.xlu0 %v323, 16
      %v464 = vpop.permute.xlu0 %463
      %v466 = vmul.f32 %v460, %v464
      %468 = vrot.lane.b32.xlu0 %v461, 96
      %v469 = vpop.permute.xlu0 %468
      %v471 = vmul.f32 %v460, %v469
      %473 = vrot.lane.b32.xlu0 %v471, 16
      %v474 = vpop.permute.xlu0 %473
      %v476 = vadd.f32 %v466, %v474
      %v477 = vtanh.pop %v476
      %479 = vrot.lane.b32.xlu0 %v477, 32
      %v480 = vpop.permute.xlu0 %479
      %v482 = vmul.f32 %v460, %v480
      %v483 = vsel %vm415, 1, 0
      %484 = vset.pattern.permute.xlu0 0
      %485 = vperm.xlu0 %484, %v483
      %v486 = vpop.permute.xlu0 %485
      %vm487 = vcmp.eq.s32.totalorder %v486, 1
      %488 = vrot.lane.b32.xlu0 %v321, 48
      %v489 = vpop.permute.xlu0 %488
      %v491 = vsel %vm487, %v482, %v489
      %v492 = vsel %vm487, %v476, %v464
      %v493 = vsel %vm487, %v482, 0.0
      %495 = vrot.lane.b32.xlu0 %v493, 80
      %v496 = vpop.permute.xlu0 %495
      %s498 = scalar_lea.vmem %s300, 6
      %499 = vst.msk [vmem:[%s498] sm:$0x3] %vm409, %v496
      %s500 = sadd.s32 %s324, 1
      %v501 = vstv %s500
      %vm502 = vcmp.lt.s32.totalorder %v501, %v312
      %s503 = scalar_lea.vmem %s279, 2
      %v504 = vld [vmem:[%s503] sm:$0x3]
      %506 = vrot.lane.b32.xlu0 %v402, 80
      %v507 = vpop.permute.xlu0 %506
      %v508 = vsel %vm328, %v507, 0
      %510 = vmatpush.msra.mxu0 0.0
      %511 = vmatpush.msra.mxu0 0.0
      %512 = vmatpush.msra.mxu0 0.0
      %513 = vmatpush.msra.mxu0 0.0
      %514 = vmatpush.msra.mxu0 0.0
      %515 = vmatpush.msra.mxu0 0.0
      %516 = vmatpush.msra.mxu0 0.0
      %517 = vmatpush.msra.mxu0 0.0
      %518 = vmatpush.msra.mxu0 0.0
      %519 = vmatpush.msra.mxu0 0.0
      %520 = vmatpush.msra.mxu0 0.0
      %521 = vmatpush.msra.mxu0 0.0
      %522 = vmatpush.msra.mxu0 0.0
      %523 = vmatpush.msra.mxu0 0.0
      %524 = vmatpush.msra.mxu0 %v314
      %525 = vmatpush.msra.mxu0 %v313
      %526 = vmatmul.f32.gmra.mxu0 %v508
      %v527 = vpop.f32.mrf.mxu0
      %v528 = vadd.f32 0.0, %v527
      %529 = vdwg.mxu0
      %v530 = vadd.f32 %v504, %v528
      %v531 = vxor.u32 %v530, 2147483648
      %v532 = vmul.f32 %v531, 1.442695
      %v533 = vpow.pop %v532
      %v534 = vadd.f32 %v533, 1.0
      %v535 = vrcp.pop %v534
      %v536 = vmul.f32 %v534, %v535
      %v537 = vsub.f32 1.0, %v536
      %v538 = vmul.f32 %v535, %v537
      %v539 = vadd.f32 %v535, %v538
      %vm540 = vweird.f32 %v534
      %vm541 = vweird.f32 %v535
      %vm542 = vmor %vm540, %vm541
      %v543 = vsel %vm542, %v535, %v539
      %v544 = vand.u32 2147483647, %v534
      %vm545 = vcmp.eq.f32.partialorder %v544, 8.507059e+37
      %v546 = vand.u32 %v534, 2147483648
      %v547 = vor.u32 1.1754944e-38, %v546
      %v548 = vsel %vm545, %v547, %v543
      %v549 = vmul.f32 1.0, %v548
      %v550 = vtanh.pop %v530
      %v551 = vmul.f32 %v549, %v403
      %553 = vrot.lane.b32.xlu0 %v550, 96
      %v554 = vpop.permute.xlu0 %553
      %v556 = vmul.f32 %v549, %v554
      %558 = vrot.lane.b32.xlu0 %v556, 16
      %v559 = vpop.permute.xlu0 %558
      %v561 = vadd.f32 %v551, %v559
      %v562 = vtanh.pop %v561
      %564 = vrot.lane.b32.xlu0 %v562, 32
      %v565 = vpop.permute.xlu0 %564
      %v567 = vmul.f32 %v549, %v565
      %v568 = vsel %vm502, 1, 0
      %569 = vset.pattern.permute.xlu0 0
      %570 = vperm.xlu0 %569, %v568
      %v571 = vpop.permute.xlu0 %570
      %vm572 = vcmp.eq.s32.totalorder %v571, 1
      %v573 = vsel %vm572, %v567, %v402
      %v574 = vsel %vm572, %v561, %v403
      %v575 = vsel %vm572, %v567, 0.0
      %577 = vrot.lane.b32.xlu0 %v575, 80
      %v578 = vpop.permute.xlu0 %577
      %s580 = scalar_lea.vmem %s293, 2
      %581 = vst.msk [vmem:[%s580] sm:$0x3] %vm409, %v578
      %s582 = sadd.s32 %s412, 2
      %v583 = vstv %s582
      %vm584 = vcmp.lt.s32.totalorder %v583, %v312
      %s585 = scalar_lea.vmem %s286, 4
      %v586 = vld [vmem:[%s585] sm:$0x3]
      %588 = vrot.lane.b32.xlu0 %v491, 80
      %v589 = vpop.permute.xlu0 %588
      %v590 = vsel %vm328, %v589, 0
      %592 = vmatpush.msra.mxu0 0.0
      %593 = vmatpush.msra.mxu0 0.0
      %594 = vmatpush.msra.mxu0 0.0
      %595 = vmatpush.msra.mxu0 0.0
      %596 = vmatpush.msra.mxu0 0.0
      %597 = vmatpush.msra.mxu0 0.0
      %598 = vmatpush.msra.mxu0 0.0
      %599 = vmatpush.msra.mxu0 0.0
      %600 = vmatpush.msra.mxu0 0.0
      %601 = vmatpush.msra.mxu0 0.0
      %602 = vmatpush.msra.mxu0 0.0
      %603 = vmatpush.msra.mxu0 0.0
      %604 = vmatpush.msra.mxu0 0.0
      %605 = vmatpush.msra.mxu0 0.0
      %606 = vmatpush.msra.mxu0 %v316
      %607 = vmatpush.msra.mxu0 %v315
      %608 = vmatmul.f32.gmra.mxu0 %v590
      %v609 = vpop.f32.mrf.mxu0
      %v610 = vadd.f32 0.0, %v609
      %611 = vdwg.mxu0
      %v612 = vadd.f32 %v586, %v610
      %v613 = vxor.u32 %v612, 2147483648
      %v614 = vmul.f32 %v613, 1.442695
      %v615 = vpow.pop %v614
      %v616 = vadd.f32 %v615, 1.0
      %v617 = vrcp.pop %v616
      %v618 = vmul.f32 %v616, %v617
      %v619 = vsub.f32 1.0, %v618
      %v620 = vmul.f32 %v617, %v619
      %v621 = vadd.f32 %v617, %v620
      %vm622 = vweird.f32 %v616
      %vm623 = vweird.f32 %v617
      %vm624 = vmor %vm622, %vm623
      %v625 = vsel %vm624, %v617, %v621
      %v626 = vand.u32 2147483647, %v616
      %vm627 = vcmp.eq.f32.partialorder %v626, 8.507059e+37
      %v628 = vand.u32 %v616, 2147483648
      %v629 = vor.u32 1.1754944e-38, %v628
      %v630 = vsel %vm627, %v629, %v625
      %v631 = vmul.f32 1.0, %v630
      %v632 = vtanh.pop %v612
      %v633 = vmul.f32 %v631, %v492
      %635 = vrot.lane.b32.xlu0 %v632, 96
      %v636 = vpop.permute.xlu0 %635
      %v638 = vmul.f32 %v631, %v636
      %640 = vrot.lane.b32.xlu0 %v638, 16
      %v641 = vpop.permute.xlu0 %640
      %v643 = vadd.f32 %v633, %v641
      %v644 = vtanh.pop %v643
      %646 = vrot.lane.b32.xlu0 %v644, 32
      %v647 = vpop.permute.xlu0 %646
      %v649 = vmul.f32 %v631, %v647
      %v650 = vsel %vm584, 1, 0
      %651 = vset.pattern.permute.xlu0 0
      %652 = vperm.xlu0 %651, %v650
      %v653 = vpop.permute.xlu0 %652
      %vm654 = vcmp.eq.s32.totalorder %v653, 1
      %v655 = vsel %vm654, %v649, %v491
      %v656 = vsel %vm654, %v643, %v492
      %v657 = vsel %vm654, %v649, 0.0
      %659 = vrot.lane.b32.xlu0 %v657, 80
      %v660 = vpop.permute.xlu0 %659
      %s662 = scalar_lea.vmem %s300, 4
      %663 = vst.msk [vmem:[%s662] sm:$0x3] %vm409, %v660
      %s664 = sadd.s32 %s324, 2
      %v665 = vstv %s664
      %vm666 = vcmp.lt.s32.totalorder %v665, %v312
      %s667 = scalar_lea.vmem %s279, 4
      %v668 = vld [vmem:[%s667] sm:$0x3]
      %670 = vrot.lane.b32.xlu0 %v573, 80
      %v671 = vpop.permute.xlu0 %670
      %v672 = vsel %vm328, %v671, 0
      %674 = vmatpush.msra.mxu0 0.0
      %675 = vmatpush.msra.mxu0 0.0
      %676 = vmatpush.msra.mxu0 0.0
      %677 = vmatpush.msra.mxu0 0.0
      %678 = vmatpush.msra.mxu0 0.0
      %679 = vmatpush.msra.mxu0 0.0
      %680 = vmatpush.msra.mxu0 0.0
      %681 = vmatpush.msra.mxu0 0.0
      %682 = vmatpush.msra.mxu0 0.0
      %683 = vmatpush.msra.mxu0 0.0
      %684 = vmatpush.msra.mxu0 0.0
      %685 = vmatpush.msra.mxu0 0.0
      %686 = vmatpush.msra.mxu0 0.0
      %687 = vmatpush.msra.mxu0 0.0
      %688 = vmatpush.msra.mxu0 %v314
      %689 = vmatpush.msra.mxu0 %v313
      %690 = vmatmul.f32.gmra.mxu0 %v672
      %v691 = vpop.f32.mrf.mxu0
      %v692 = vadd.f32 0.0, %v691
      %693 = vdwg.mxu0
      %v694 = vadd.f32 %v668, %v692
      %v695 = vxor.u32 %v694, 2147483648
      %v696 = vmul.f32 %v695, 1.442695
      %v697 = vpow.pop %v696
      %v698 = vadd.f32 %v697, 1.0
      %v699 = vrcp.pop %v698
      %v700 = vmul.f32 %v698, %v699
      %v701 = vsub.f32 1.0, %v700
      %v702 = vmul.f32 %v699, %v701
      %v703 = vadd.f32 %v699, %v702
      %vm704 = vweird.f32 %v698
      %vm705 = vweird.f32 %v699
      %vm706 = vmor %vm704, %vm705
      %v707 = vsel %vm706, %v699, %v703
      %v708 = vand.u32 2147483647, %v698
      %vm709 = vcmp.eq.f32.partialorder %v708, 8.507059e+37
      %v710 = vand.u32 %v698, 2147483648
      %v711 = vor.u32 1.1754944e-38, %v710
      %v712 = vsel %vm709, %v711, %v707
      %v713 = vmul.f32 1.0, %v712
      %v714 = vtanh.pop %v694
      %v715 = vmul.f32 %v713, %v574
      %717 = vrot.lane.b32.xlu0 %v714, 96
      %v718 = vpop.permute.xlu0 %717
      %v720 = vmul.f32 %v713, %v718
      %722 = vrot.lane.b32.xlu0 %v720, 16
      %v723 = vpop.permute.xlu0 %722
      %v725 = vadd.f32 %v715, %v723
      %v726 = vtanh.pop %v725
      %728 = vrot.lane.b32.xlu0 %v726, 32
      %v729 = vpop.permute.xlu0 %728
      %v731 = vmul.f32 %v713, %v729
      %v732 = vsel %vm666, 1, 0
      %733 = vset.pattern.permute.xlu0 0
      %734 = vperm.xlu0 %733, %v732
      %v735 = vpop.permute.xlu0 %734
      %vm736 = vcmp.eq.s32.totalorder %v735, 1
      %v737 = vsel %vm736, %v731, %v573
      %v738 = vsel %vm736, %v725, %v574
      %v739 = vsel %vm736, %v731, 0.0
      %741 = vrot.lane.b32.xlu0 %v739, 80
      %v742 = vpop.permute.xlu0 %741
      %s744 = scalar_lea.vmem %s293, 4
      %745 = vst.msk [vmem:[%s744] sm:$0x3] %vm409, %v742
      %s746 = sadd.s32 %s412, 1
      %v747 = vstv %s746
      %vm748 = vcmp.lt.s32.totalorder %v747, %v312
      %s749 = scalar_lea.vmem %s286, 2
      %v750 = vld [vmem:[%s749] sm:$0x3]
      %752 = vrot.lane.b32.xlu0 %v655, 80
      %v753 = vpop.permute.xlu0 %752
      %v754 = vsel %vm328, %v753, 0
      %756 = vmatpush.msra.mxu0 0.0
      %757 = vmatpush.msra.mxu0 0.0
      %758 = vmatpush.msra.mxu0 0.0
      %759 = vmatpush.msra.mxu0 0.0
      %760 = vmatpush.msra.mxu0 0.0
      %761 = vmatpush.msra.mxu0 0.0
      %762 = vmatpush.msra.mxu0 0.0
      %763 = vmatpush.msra.mxu0 0.0
      %764 = vmatpush.msra.mxu0 0.0
      %765 = vmatpush.msra.mxu0 0.0
      %766 = vmatpush.msra.mxu0 0.0
      %767 = vmatpush.msra.mxu0 0.0
      %768 = vmatpush.msra.mxu0 0.0
      %769 = vmatpush.msra.mxu0 0.0
      %770 = vmatpush.msra.mxu0 %v316
      %771 = vmatpush.msra.mxu0 %v315
      %772 = vmatmul.f32.gmra.mxu0 %v754
      %v773 = vpop.f32.mrf.mxu0
      %v774 = vadd.f32 0.0, %v773
      %775 = vdwg.mxu0
      %v776 = vadd.f32 %v750, %v774
      %v777 = vxor.u32 %v776, 2147483648
      %v778 = vmul.f32 %v777, 1.442695
      %v779 = vpow.pop %v778
      %v780 = vadd.f32 %v779, 1.0
      %v781 = vrcp.pop %v780
      %v782 = vmul.f32 %v780, %v781
      %v783 = vsub.f32 1.0, %v782
      %v784 = vmul.f32 %v781, %v783
      %v785 = vadd.f32 %v781, %v784
      %vm786 = vweird.f32 %v780
      %vm787 = vweird.f32 %v781
      %vm788 = vmor %vm786, %vm787
      %v789 = vsel %vm788, %v781, %v785
      %v790 = vand.u32 2147483647, %v780
      %vm791 = vcmp.eq.f32.partialorder %v790, 8.507059e+37
      %v792 = vand.u32 %v780, 2147483648
      %v793 = vor.u32 1.1754944e-38, %v792
      %v794 = vsel %vm791, %v793, %v789
      %v795 = vmul.f32 1.0, %v794
      %v796 = vtanh.pop %v776
      %v797 = vmul.f32 %v795, %v656
      %799 = vrot.lane.b32.xlu0 %v796, 96
      %v800 = vpop.permute.xlu0 %799
      %v802 = vmul.f32 %v795, %v800
      %804 = vrot.lane.b32.xlu0 %v802, 16
      %v805 = vpop.permute.xlu0 %804
      %v807 = vadd.f32 %v797, %v805
      %v808 = vtanh.pop %v807
      %810 = vrot.lane.b32.xlu0 %v808, 32
      %v811 = vpop.permute.xlu0 %810
      %v813 = vmul.f32 %v795, %v811
      %v814 = vsel %vm748, 1, 0
      %815 = vset.pattern.permute.xlu0 0
      %816 = vperm.xlu0 %815, %v814
      %v817 = vpop.permute.xlu0 %816
      %vm818 = vcmp.eq.s32.totalorder %v817, 1
      %v819 = vsel %vm818, %v813, %v655
      %v820 = vsel %vm818, %v807, %v656
      %v821 = vsel %vm818, %v813, 0.0
      %823 = vrot.lane.b32.xlu0 %v821, 80
      %v824 = vpop.permute.xlu0 %823
      %s826 = scalar_lea.vmem %s300, 2
      %827 = vst.msk [vmem:[%s826] sm:$0x3] %vm409, %v824
      %s828 = sadd.s32 %s324, 3
      %v829 = vstv %s828
      %vm830 = vcmp.lt.s32.totalorder %v829, %v312
      %s831 = scalar_lea.vmem %s279, 6
      %v832 = vld [vmem:[%s831] sm:$0x3]
      %834 = vrot.lane.b32.xlu0 %v737, 80
      %v835 = vpop.permute.xlu0 %834
      %v836 = vsel %vm328, %v835, 0
      %838 = vmatpush.msra.mxu0 0.0
      %839 = vmatpush.msra.mxu0 0.0
      %840 = vmatpush.msra.mxu0 0.0
      %841 = vmatpush.msra.mxu0 0.0
      %842 = vmatpush.msra.mxu0 0.0
      %843 = vmatpush.msra.mxu0 0.0
      %844 = vmatpush.msra.mxu0 0.0
      %845 = vmatpush.msra.mxu0 0.0
      %846 = vmatpush.msra.mxu0 0.0
      %847 = vmatpush.msra.mxu0 0.0
      %848 = vmatpush.msra.mxu0 0.0
      %849 = vmatpush.msra.mxu0 0.0
      %850 = vmatpush.msra.mxu0 0.0
      %851 = vmatpush.msra.mxu0 0.0
      %852 = vmatpush.msra.mxu0 %v314
      %853 = vmatpush.msra.mxu0 %v313
      %854 = vmatmul.f32.gmra.mxu0 %v836
      %v855 = vpop.f32.mrf.mxu0
      %v856 = vadd.f32 0.0, %v855
      %857 = vdwg.mxu0
      %v858 = vadd.f32 %v832, %v856
      %v859 = vxor.u32 %v858, 2147483648
      %v860 = vmul.f32 %v859, 1.442695
      %v861 = vpow.pop %v860
      %v862 = vadd.f32 %v861, 1.0
      %v863 = vrcp.pop %v862
      %v864 = vmul.f32 %v862, %v863
      %v865 = vsub.f32 1.0, %v864
      %v866 = vmul.f32 %v863, %v865
      %v867 = vadd.f32 %v863, %v866
      %vm868 = vweird.f32 %v862
      %vm869 = vweird.f32 %v863
      %vm870 = vmor %vm868, %vm869
      %v871 = vsel %vm870, %v863, %v867
      %v872 = vand.u32 2147483647, %v862
      %vm873 = vcmp.eq.f32.partialorder %v872, 8.507059e+37
      %v874 = vand.u32 %v862, 2147483648
      %v875 = vor.u32 1.1754944e-38, %v874
      %v876 = vsel %vm873, %v875, %v871
      %v877 = vmul.f32 1.0, %v876
      %v878 = vtanh.pop %v858
      %v879 = vmul.f32 %v877, %v738
      %881 = vrot.lane.b32.xlu0 %v878, 96
      %v882 = vpop.permute.xlu0 %881
      %v884 = vmul.f32 %v877, %v882
      %886 = vrot.lane.b32.xlu0 %v884, 16
      %v887 = vpop.permute.xlu0 %886
      %v889 = vadd.f32 %v879, %v887
      %v890 = vtanh.pop %v889
      %892 = vrot.lane.b32.xlu0 %v890, 32
      %v893 = vpop.permute.xlu0 %892
      %v895 = vmul.f32 %v877, %v893
      %v896 = vsel %vm830, 1, 0
      %897 = vset.pattern.permute.xlu0 0
      %898 = vperm.xlu0 %897, %v896
      %v899 = vpop.permute.xlu0 %898
      %vm900 = vcmp.eq.s32.totalorder %v899, 1
      %v901 = vsel %vm900, %v895, %v737
      %v902 = vsel %vm900, %v889, %v738
      %v903 = vsel %vm900, %v895, 0.0
      %905 = vrot.lane.b32.xlu0 %v903, 80
      %v906 = vpop.permute.xlu0 %905
      %s908 = scalar_lea.vmem %s293, 6
      %909 = vst.msk [vmem:[%s908] sm:$0x3] %vm409, %v906
      %v910 = vstv %s412
      %vm911 = vcmp.lt.s32.totalorder %v910, %v312
      %v912 = vld [vmem:[%s286] sm:$0x3]
      %914 = vrot.lane.b32.xlu0 %v819, 80
      %v915 = vpop.permute.xlu0 %914
      %v916 = vsel %vm328, %v915, 0
      %918 = vmatpush.msra.mxu0 0.0
      %919 = vmatpush.msra.mxu0 0.0
      %920 = vmatpush.msra.mxu0 0.0
      %921 = vmatpush.msra.mxu0 0.0
      %922 = vmatpush.msra.mxu0 0.0
      %923 = vmatpush.msra.mxu0 0.0
      %924 = vmatpush.msra.mxu0 0.0
      %925 = vmatpush.msra.mxu0 0.0
      %926 = vmatpush.msra.mxu0 0.0
      %927 = vmatpush.msra.mxu0 0.0
      %928 = vmatpush.msra.mxu0 0.0
      %929 = vmatpush.msra.mxu0 0.0
      %930 = vmatpush.msra.mxu0 0.0
      %931 = vmatpush.msra.mxu0 0.0
      %932 = vmatpush.msra.mxu0 %v316
      %933 = vmatpush.msra.mxu0 %v315
      %934 = vmatmul.f32.gmra.mxu0 %v916
      %v935 = vpop.f32.mrf.mxu0
      %v936 = vadd.f32 0.0, %v935
      %937 = vdwg.mxu0
      %v938 = vadd.f32 %v912, %v936
      %v939 = vxor.u32 %v938, 2147483648
      %v940 = vmul.f32 %v939, 1.442695
      %v941 = vpow.pop %v940
      %v942 = vadd.f32 %v941, 1.0
      %v943 = vrcp.pop %v942
      %v944 = vmul.f32 %v942, %v943
      %v945 = vsub.f32 1.0, %v944
      %v946 = vmul.f32 %v943, %v945
      %v947 = vadd.f32 %v943, %v946
      %vm948 = vweird.f32 %v942
      %vm949 = vweird.f32 %v943
      %vm950 = vmor %vm948, %vm949
      %v951 = vsel %vm950, %v943, %v947
      %v952 = vand.u32 2147483647, %v942
      %vm953 = vcmp.eq.f32.partialorder %v952, 8.507059e+37
      %v954 = vand.u32 %v942, 2147483648
      %v955 = vor.u32 1.1754944e-38, %v954
      %v956 = vsel %vm953, %v955, %v951
      %v957 = vmul.f32 1.0, %v956
      %v958 = vtanh.pop %v938
      %v959 = vmul.f32 %v957, %v820
      %961 = vrot.lane.b32.xlu0 %v958, 96
      %v962 = vpop.permute.xlu0 %961
      %v964 = vmul.f32 %v957, %v962
      %966 = vrot.lane.b32.xlu0 %v964, 16
      %v967 = vpop.permute.xlu0 %966
      %v969 = vadd.f32 %v959, %v967
      %v970 = vtanh.pop %v969
      %972 = vrot.lane.b32.xlu0 %v970, 32
      %v973 = vpop.permute.xlu0 %972
      %v975 = vmul.f32 %v957, %v973
      %v976 = vsel %vm911, 1, 0
      %977 = vset.pattern.permute.xlu0 0
      %978 = vperm.xlu0 %977, %v976
      %v979 = vpop.permute.xlu0 %978
      %vm980 = vcmp.eq.s32.totalorder %v979, 1
      %v981 = vsel %vm980, %v975, %v819
      %v982 = vsel %vm980, %v969, %v820
      %v983 = vsel %vm980, %v975, 0.0
      %985 = vrot.lane.b32.xlu0 %v983, 80
      %v986 = vpop.permute.xlu0 %985
      %988 = vst.msk [vmem:[%s300] sm:$0x3] %vm409, %v986
      %990 = vrot.lane.b32.xlu0 %v901, 80
      %v991 = vpop.permute.xlu0 %990
      %993 = vst.msk [vmem:[#allocation2] sm:$0x3] %vm409, %v991
      %995 = vrot.lane.b32.xlu0 %v902, 112
      %v996 = vpop.permute.xlu0 %995
      %998 = vst.msk [vmem:[%s318] sm:$0x3] %vm409, %v996
      %1000 = vrot.lane.b32.xlu0 %v981, 80
      %v1001 = vpop.permute.xlu0 %1000
      %1003 = vst.msk [vmem:[%s320] sm:$0x3] %vm409, %v1001
      %1005 = vrot.lane.b32.xlu0 %v982, 112
      %v1006 = vpop.permute.xlu0 %1005
      %1008 = vst.msk [vmem:[%s322] sm:$0x3] %vm409, %v1006
      %s1009 = smul.u32 4, %s18
      %p1010 = scmp.lt.s32.totalorder %s1009, 7
      %s1011 = scalar_select %p1010, %s1009, 7
      %s1012 = smul.addr %s1011, 2
      %s1013 = scalar_lea.vmem %s5, %s1012
      %s1014 = ssub.s32 1, %s18
      %s1015 = smul.u32 4, %s1014
      %p1016 = scmp.lt.s32.totalorder %s1015, 7
      %s1017 = scalar_select %p1016, %s1015, 7
      %s1018 = smul.addr %s1017, 2
      %s1019 = scalar_lea.vmem %s6, %s1018
      // Predicated region
      $region45: #{_lambda_.1} parent=39 // pred_check
        %p1020 = pneg %p153
      $region46: #{_lambda_.1} parent=39 // pred_check_branch
        %1022 = sbr.rel (%p1020) target = $region48
      $region47: #{_lambda_.1} parent=39 // pred_region
        %s1023 = smul.u32 4, %s18
      $region48: #{_lambda_.1} parent=39 // pred_fallthru
        _
      // Predicated region
      $region49: #{_lambda_.1} parent=39 // pred_check
        %p1024 = pneg %p181
      $region50: #{_lambda_.1} parent=39 // pred_check_branch
        %1026 = sbr.rel (%p1024) target = $region52
      $region51: #{_lambda_.1} parent=39 // pred_region
        %s1027 = ssub.s32 1, %s18
        %s1028 = smul.u32 4, %s1027
      $region52: #{_lambda_.1} parent=39 // pred_fallthru
        _
    $region40: #{_lambda_.1} parent=5 // pred_fallthru
      _
    %p1029 = scmp.le.s32.totalorder 2, %s13
    // Predicated region
    $region53: #{_lambda_.1} parent=5 // pred_check
      %p1030 = pneg %p1029
    $region54: #{_lambda_.1} parent=5 // pred_check_branch
      %1032 = sbr.rel (%p1030) target = $region56
    $region55: #{_lambda_.1} parent=5 // pred_region
      %s1033 = ssub.s32 %s13, 2
      // Predicated region
      $region57: #{_lambda_.1} parent=55 // pred_check
        %p1034 = pneg %p159
      $region58: #{_lambda_.1} parent=55 // pred_check_branch
        %1036 = sbr.rel (%p1034) target = $region60
      $region59: #{_lambda_.1} parent=55 // pred_region
        %s1037 = smul.u32 4, %s19
        %p1038 = scmp.lt.s32.totalorder %s1037, 7
        %s1039 = scalar_select %p1038, %s1037, 7
        %s1040 = smul.addr %s1039, 2
        %s1041 = scalar_lea.vmem %s5, %s1040
      $region60: #{_lambda_.1} parent=55 // pred_fallthru
        _
      // Predicated region
      $region61: #{_lambda_.1} parent=55 // pred_check
        %p1042 = pneg %p187
      $region62: #{_lambda_.1} parent=55 // pred_check_branch
        %1044 = sbr.rel (%p1042) target = $region64
      $region63: #{_lambda_.1} parent=55 // pred_region
        %s1045 = ssub.s32 1, %s19
        %s1046 = smul.u32 4, %s1045
        %p1047 = scmp.lt.s32.totalorder %s1046, 7
        %s1048 = scalar_select %p1047, %s1046, 7
        %s1049 = smul.addr %s1048, 2
        %s1050 = scalar_lea.vmem %s6, %s1049
      $region64: #{_lambda_.1} parent=55 // pred_fallthru
        _
    $region56: #{_lambda_.1} parent=5 // pred_fallthru
      _
  $region6: #{_lambda_.1} parent=0 // loop_footer
    %s17 = sadd.s32 1, %s13
  $region7: #{_lambda_.1} parent=0 // loop_footer_branch
    %12 = sbr.rel target = $region3
  $region8: #{_lambda_.1} parent=0 // loop_exit
    _

</llo_original>
